<compile_context>
chip_gen: v7x
topology: tpu7x:2x2x1
jax: 0.10.0
libtpu: 0.0.40
codegen_flags: <defaults>
</compile_context>

<pallas_src>
import jax
import jax.numpy as jnp
from jax.experimental import pallas as pl
from jax.experimental.pallas import tpu as pltpu

HIDDEN = 256
MAX_TILE_B = 256  # fills the MXU M dimension on v6e/v7x; safe for v7x's 64 MiB VMEM


def _round_up(n, m):
    return ((n + m - 1) // m) * m


def _sigmoid(z):
    # Single-EUP sigmoid: 0.5 * (tanh(z/2) + 1) == 1 / (1 + exp(-z))
    return 0.5 * (jnp.tanh(0.5 * z) + 1.0)


def _net_raissi_kernel(x_ref,
                       w1f, w1b, b1, w2f, w2b, b2, w3f, w3b, b3,
                       w4f, w4b, b4, w5f, w5b, b5, w6, b6,
                       out_ref, gradx_ref):
    """Forward MLP + analytic backprop of d(out)/d(x) for one batch tile."""
    x = x_ref[...]                                   # (TILE_B, dim+1)

    fwd_ws = (w1f, w2f, w3f, w4f, w5f)               # (in, out) layout
    bwd_ws = (w1b, w2b, w3b, w4b, w5b)               # (out, in) layout (original torch)
    biases = (b1, b2, b3, b4, b5)                    # (1, out)

    # ---- forward ----
    h = x
    hs = []
    for w_r, b_r in zip(fwd_ws, biases):
        z = jnp.dot(h, w_r[...], preferred_element_type=jnp.float32) + b_r[...]
        h = _sigmoid(z)
        hs.append(h)

    # Output layer (out_features = 1): VPU multiply + cross-lane reduce, no MXU.
    w6_row = w6[...]                                 # (1, HIDDEN)
    out_ref[...] = jnp.sum(h * w6_row, axis=-1, keepdims=True) + b6[...]

    # ---- backward: d(out)/d(x), per row ----
    g = w6_row                                       # seed, broadcasts over batch
    for i in range(4, -1, -1):
        h_i = hs[i]
        g = g * h_i * (1.0 - h_i)                    # sigmoid' reuses saved h
        g = jnp.dot(g, bwd_ws[i][...],
                    preferred_element_type=jnp.float32)  # (TILE_B, in_i)

    # Drop the time column (column 0) inside the kernel.
    gradx_ref[...] = g[:, 1:]                        # (TILE_B, dim)


def net_raissi_pallas(x, params, tile_b=MAX_TILE_B):
    """x: (B, dim+1). params: list of (W, b), W in PyTorch (out, in) layout, b (1, out)."""
    B, Din = x.shape
    dim = Din - 1

    tile_b = min(tile_b, _round_up(B, 8))
    tile_b = _round_up(tile_b, 8)
    B_pad = _round_up(B, tile_b)
    if B_pad != B:
        x = jnp.pad(x, ((0, B_pad - B), (0, 0)))

    # Pack params: hidden layers get both layouts (forward (in,out), backward (out,in)).
    flat = []
    for (w, b) in params[:-1]:
        flat += [w.T, w, b]
    w6, b6 = params[-1]
    flat += [w6, b6]

    grid = (B_pad // tile_b,)

    def row_spec(feat):
        return pl.BlockSpec((tile_b, feat), lambda i: (i, 0))

    def const_spec(a):
        return pl.BlockSpec(a.shape, lambda i: (0, 0))

    out, gradx = pl.pallas_call(
        _net_raissi_kernel,
        out_shape=(jax.ShapeDtypeStruct((B_pad, 1), jnp.float32),
                   jax.ShapeDtypeStruct((B_pad, dim), jnp.float32)),
        grid=grid,
        in_specs=[row_spec(Din)] + [const_spec(a) for a in flat],
        out_specs=(row_spec(1), row_spec(dim)),
        compiler_params=pltpu.CompilerParams(
            dimension_semantics=("parallel",)),
    )(x, *flat)

    return out[:B], gradx[:B]


def _ref_forward(params, x):
    h = x
    for w, b in params[:-1]:
        h = jax.nn.sigmoid(h @ w.T + b)
    w, b = params[-1]
    return h @ w.T + b


if __name__ == "__main__":
    dim = 4
    key = jax.random.PRNGKey(0)

    layer_dims = [(dim + 1, HIDDEN)] + [(HIDDEN, HIDDEN)] * 4 + [(HIDDEN, 1)]
    params = []
    for (n_in, n_out) in layer_dims:
        key, kw, kb = jax.random.split(key, 3)
        scale = 1.0 / jnp.sqrt(jnp.float32(n_in))
        w = jax.random.uniform(kw, (n_out, n_in), jnp.float32, -scale, scale)
        b = jax.random.uniform(kb, (1, n_out), jnp.float32, -scale, scale)
        params.append((w, b))

    # --- small run (single tile) ---
    key, kx = jax.random.split(key)
    B = 8
    x = jax.random.normal(kx, (B, dim + 1), jnp.float32)

    out, gradx = net_raissi_pallas(x, params)
    out = jax.block_until_ready(out)
    gradx = jax.block_until_ready(gradx)

    out_ref = _ref_forward(params, x)
    grad_ref = jax.grad(lambda xx: _ref_forward(params, xx).sum())(x)[:, 1:]
    assert out.shape == (B, 1) and gradx.shape == (B, dim)
    assert jnp.allclose(out, out_ref, atol=1e-4, rtol=1e-4)
    assert jnp.allclose(gradx, grad_ref, atol=1e-4, rtol=1e-4)

    # --- multi-tile run exercising the batch grid + padding path ---
    key, kx2 = jax.random.split(key)
    B2 = 200
    x2 = jax.random.normal(kx2, (B2, dim + 1), jnp.float32)

    out2, gradx2 = net_raissi_pallas(x2, params, tile_b=64)
    out2 = jax.block_until_ready(out2)
    gradx2 = jax.block_until_ready(gradx2)

    out2_ref = _ref_forward(params, x2)
    grad2_ref = jax.grad(lambda xx: _ref_forward(params, xx).sum())(x2)[:, 1:]
    assert out2.shape == (B2, 1) and gradx2.shape == (B2, dim)
    assert jnp.allclose(out2, out2_ref, atol=1e-4, rtol=1e-4)
    assert jnp.allclose(gradx2, grad2_ref, atol=1e-4, rtol=1e-4)

    print("KERNEL_OK")
</pallas_src>

<mosaic_0001>
module attributes {stable_mosaic.version = 11 : i64} {
  func.func @_net_raissi_kernel(%arg0: i32, %arg1: memref<8x5xf32, #tpu.memory_space<vmem>>, %arg2: memref<5x256xf32, #tpu.memory_space<vmem>>, %arg3: memref<256x5xf32, #tpu.memory_space<vmem>>, %arg4: memref<1x256xf32, #tpu.memory_space<vmem>>, %arg5: memref<256x256xf32, #tpu.memory_space<vmem>>, %arg6: memref<256x256xf32, #tpu.memory_space<vmem>>, %arg7: memref<1x256xf32, #tpu.memory_space<vmem>>, %arg8: memref<256x256xf32, #tpu.memory_space<vmem>>, %arg9: memref<256x256xf32, #tpu.memory_space<vmem>>, %arg10: memref<1x256xf32, #tpu.memory_space<vmem>>, %arg11: memref<256x256xf32, #tpu.memory_space<vmem>>, %arg12: memref<256x256xf32, #tpu.memory_space<vmem>>, %arg13: memref<1x256xf32, #tpu.memory_space<vmem>>, %arg14: memref<256x256xf32, #tpu.memory_space<vmem>>, %arg15: memref<256x256xf32, #tpu.memory_space<vmem>>, %arg16: memref<1x256xf32, #tpu.memory_space<vmem>>, %arg17: memref<1x256xf32, #tpu.memory_space<vmem>>, %arg18: memref<1x1xf32, #tpu.memory_space<vmem>>, %arg19: memref<8x1xf32, #tpu.memory_space<vmem>>, %arg20: memref<8x4xf32, #tpu.memory_space<vmem>>) attributes {dimension_semantics = [#tpu.dimension_semantics<parallel>], iteration_bounds = array<i64: 1>, scalar_prefetch = 0 : i64, scratch_operands = 0 : i64, tpu.core_type = #tpu.core_type<tc>, window_params = [{transform_indices = @transform_0, window_bounds = array<i64: 8, 5>}, {pipeline_mode = #tpu.pipeline_mode<synchronous>, transform_indices = @transform_1, window_bounds = array<i64: 5, 256>}, {pipeline_mode = #tpu.pipeline_mode<synchronous>, transform_indices = @transform_2, window_bounds = array<i64: 256, 5>}, {pipeline_mode = #tpu.pipeline_mode<synchronous>, transform_indices = @transform_3, window_bounds = array<i64: 1, 256>}, {pipeline_mode = #tpu.pipeline_mode<synchronous>, transform_indices = @transform_4, window_bounds = array<i64: 256, 256>}, {pipeline_mode = #tpu.pipeline_mode<synchronous>, transform_indices = @transform_5, window_bounds = array<i64: 256, 256>}, {pipeline_mode = #tpu.pipeline_mode<synchronous>, transform_indices = @transform_6, window_bounds = array<i64: 1, 256>}, {pipeline_mode = #tpu.pipeline_mode<synchronous>, transform_indices = @transform_7, window_bounds = array<i64: 256, 256>}, {pipeline_mode = #tpu.pipeline_mode<synchronous>, transform_indices = @transform_8, window_bounds = array<i64: 256, 256>}, {pipeline_mode = #tpu.pipeline_mode<synchronous>, transform_indices = @transform_9, window_bounds = array<i64: 1, 256>}, {pipeline_mode = #tpu.pipeline_mode<synchronous>, transform_indices = @transform_10, window_bounds = array<i64: 256, 256>}, {pipeline_mode = #tpu.pipeline_mode<synchronous>, transform_indices = @transform_11, window_bounds = array<i64: 256, 256>}, {pipeline_mode = #tpu.pipeline_mode<synchronous>, transform_indices = @transform_12, window_bounds = array<i64: 1, 256>}, {pipeline_mode = #tpu.pipeline_mode<synchronous>, transform_indices = @transform_13, window_bounds = array<i64: 256, 256>}, {pipeline_mode = #tpu.pipeline_mode<synchronous>, transform_indices = @transform_14, window_bounds = array<i64: 256, 256>}, {pipeline_mode = #tpu.pipeline_mode<synchronous>, transform_indices = @transform_15, window_bounds = array<i64: 1, 256>}, {pipeline_mode = #tpu.pipeline_mode<synchronous>, transform_indices = @transform_16, window_bounds = array<i64: 1, 256>}, {pipeline_mode = #tpu.pipeline_mode<synchronous>, transform_indices = @transform_17, window_bounds = array<i64: 1, 1>}, {transform_indices = @transform_18, window_bounds = array<i64: 8, 1>}, {transform_indices = @transform_19, window_bounds = array<i64: 8, 4>}]} {
    %c0 = arith.constant 0 : index
    %c0_0 = arith.constant 0 : index
    %0 = vector.load %arg1[%c0, %c0_0] : memref<8x5xf32, #tpu.memory_space<vmem>>, vector<8x5xf32>
    %c0_1 = arith.constant 0 : index
    %c0_2 = arith.constant 0 : index
    %1 = vector.load %arg2[%c0_1, %c0_2] : memref<5x256xf32, #tpu.memory_space<vmem>>, vector<5x256xf32>
    %cst = arith.constant dense<0.000000e+00> : vector<8x256xf32>
    %2 = tpu.matmul %0, %1, %cst {dimension_numbers = #tpu.dot_dimension_numbers<[1], [0], [0], [1], [0, 0, 1, 1], [], []>} : vector<8x5xf32>, vector<5x256xf32>, vector<8x256xf32> -> vector<8x256xf32>
    %c0_3 = arith.constant 0 : index
    %c0_4 = arith.constant 0 : index
    %3 = vector.load %arg4[%c0_3, %c0_4] : memref<1x256xf32, #tpu.memory_space<vmem>>, vector<1x256xf32>
    %4 = vector.broadcast %3 : vector<1x256xf32> to vector<8x256xf32>
    %5 = arith.addf %2, %4 : vector<8x256xf32>
    %cst_5 = arith.constant 5.000000e-01 : f32
    %6 = vector.broadcast %cst_5 : f32 to vector<8x256xf32>
    %7 = arith.mulf %6, %5 : vector<8x256xf32>
    %8 = math.tanh %7 : vector<8x256xf32>
    %cst_6 = arith.constant 1.000000e+00 : f32
    %9 = vector.broadcast %cst_6 : f32 to vector<8x256xf32>
    %10 = arith.addf %8, %9 : vector<8x256xf32>
    %cst_7 = arith.constant 5.000000e-01 : f32
    %11 = vector.broadcast %cst_7 : f32 to vector<8x256xf32>
    %12 = arith.mulf %11, %10 : vector<8x256xf32>
    %c0_8 = arith.constant 0 : index
    %c0_9 = arith.constant 0 : index
    %13 = vector.load %arg5[%c0_8, %c0_9] : memref<256x256xf32, #tpu.memory_space<vmem>>, vector<256x256xf32>
    %cst_10 = arith.constant dense<0.000000e+00> : vector<8x256xf32>
    %14 = tpu.matmul %12, %13, %cst_10 {dimension_numbers = #tpu.dot_dimension_numbers<[1], [0], [0], [1], [0, 0, 1, 1], [], []>} : vector<8x256xf32>, vector<256x256xf32>, vector<8x256xf32> -> vector<8x256xf32>
    %c0_11 = arith.constant 0 : index
    %c0_12 = arith.constant 0 : index
    %15 = vector.load %arg7[%c0_11, %c0_12] : memref<1x256xf32, #tpu.memory_space<vmem>>, vector<1x256xf32>
    %16 = vector.broadcast %15 : vector<1x256xf32> to vector<8x256xf32>
    %17 = arith.addf %14, %16 : vector<8x256xf32>
    %cst_13 = arith.constant 5.000000e-01 : f32
    %18 = vector.broadcast %cst_13 : f32 to vector<8x256xf32>
    %19 = arith.mulf %18, %17 : vector<8x256xf32>
    %20 = math.tanh %19 : vector<8x256xf32>
    %cst_14 = arith.constant 1.000000e+00 : f32
    %21 = vector.broadcast %cst_14 : f32 to vector<8x256xf32>
    %22 = arith.addf %20, %21 : vector<8x256xf32>
    %cst_15 = arith.constant 5.000000e-01 : f32
    %23 = vector.broadcast %cst_15 : f32 to vector<8x256xf32>
    %24 = arith.mulf %23, %22 : vector<8x256xf32>
    %c0_16 = arith.constant 0 : index
    %c0_17 = arith.constant 0 : index
    %25 = vector.load %arg8[%c0_16, %c0_17] : memref<256x256xf32, #tpu.memory_space<vmem>>, vector<256x256xf32>
    %cst_18 = arith.constant dense<0.000000e+00> : vector<8x256xf32>
    %26 = tpu.matmul %24, %25, %cst_18 {dimension_numbers = #tpu.dot_dimension_numbers<[1], [0], [0], [1], [0, 0, 1, 1], [], []>} : vector<8x256xf32>, vector<256x256xf32>, vector<8x256xf32> -> vector<8x256xf32>
    %c0_19 = arith.constant 0 : index
    %c0_20 = arith.constant 0 : index
    %27 = vector.load %arg10[%c0_19, %c0_20] : memref<1x256xf32, #tpu.memory_space<vmem>>, vector<1x256xf32>
    %28 = vector.broadcast %27 : vector<1x256xf32> to vector<8x256xf32>
    %29 = arith.addf %26, %28 : vector<8x256xf32>
    %cst_21 = arith.constant 5.000000e-01 : f32
    %30 = vector.broadcast %cst_21 : f32 to vector<8x256xf32>
    %31 = arith.mulf %30, %29 : vector<8x256xf32>
    %32 = math.tanh %31 : vector<8x256xf32>
    %cst_22 = arith.constant 1.000000e+00 : f32
    %33 = vector.broadcast %cst_22 : f32 to vector<8x256xf32>
    %34 = arith.addf %32, %33 : vector<8x256xf32>
    %cst_23 = arith.constant 5.000000e-01 : f32
    %35 = vector.broadcast %cst_23 : f32 to vector<8x256xf32>
    %36 = arith.mulf %35, %34 : vector<8x256xf32>
    %c0_24 = arith.constant 0 : index
    %c0_25 = arith.constant 0 : index
    %37 = vector.load %arg11[%c0_24, %c0_25] : memref<256x256xf32, #tpu.memory_space<vmem>>, vector<256x256xf32>
    %cst_26 = arith.constant dense<0.000000e+00> : vector<8x256xf32>
    %38 = tpu.matmul %36, %37, %cst_26 {dimension_numbers = #tpu.dot_dimension_numbers<[1], [0], [0], [1], [0, 0, 1, 1], [], []>} : vector<8x256xf32>, vector<256x256xf32>, vector<8x256xf32> -> vector<8x256xf32>
    %c0_27 = arith.constant 0 : index
    %c0_28 = arith.constant 0 : index
    %39 = vector.load %arg13[%c0_27, %c0_28] : memref<1x256xf32, #tpu.memory_space<vmem>>, vector<1x256xf32>
    %40 = vector.broadcast %39 : vector<1x256xf32> to vector<8x256xf32>
    %41 = arith.addf %38, %40 : vector<8x256xf32>
    %cst_29 = arith.constant 5.000000e-01 : f32
    %42 = vector.broadcast %cst_29 : f32 to vector<8x256xf32>
    %43 = arith.mulf %42, %41 : vector<8x256xf32>
    %44 = math.tanh %43 : vector<8x256xf32>
    %cst_30 = arith.constant 1.000000e+00 : f32
    %45 = vector.broadcast %cst_30 : f32 to vector<8x256xf32>
    %46 = arith.addf %44, %45 : vector<8x256xf32>
    %cst_31 = arith.constant 5.000000e-01 : f32
    %47 = vector.broadcast %cst_31 : f32 to vector<8x256xf32>
    %48 = arith.mulf %47, %46 : vector<8x256xf32>
    %c0_32 = arith.constant 0 : index
    %c0_33 = arith.constant 0 : index
    %49 = vector.load %arg14[%c0_32, %c0_33] : memref<256x256xf32, #tpu.memory_space<vmem>>, vector<256x256xf32>
    %cst_34 = arith.constant dense<0.000000e+00> : vector<8x256xf32>
    %50 = tpu.matmul %48, %49, %cst_34 {dimension_numbers = #tpu.dot_dimension_numbers<[1], [0], [0], [1], [0, 0, 1, 1], [], []>} : vector<8x256xf32>, vector<256x256xf32>, vector<8x256xf32> -> vector<8x256xf32>
    %c0_35 = arith.constant 0 : index
    %c0_36 = arith.constant 0 : index
    %51 = vector.load %arg16[%c0_35, %c0_36] : memref<1x256xf32, #tpu.memory_space<vmem>>, vector<1x256xf32>
    %52 = vector.broadcast %51 : vector<1x256xf32> to vector<8x256xf32>
    %53 = arith.addf %50, %52 : vector<8x256xf32>
    %cst_37 = arith.constant 5.000000e-01 : f32
    %54 = vector.broadcast %cst_37 : f32 to vector<8x256xf32>
    %55 = arith.mulf %54, %53 : vector<8x256xf32>
    %56 = math.tanh %55 : vector<8x256xf32>
    %cst_38 = arith.constant 1.000000e+00 : f32
    %57 = vector.broadcast %cst_38 : f32 to vector<8x256xf32>
    %58 = arith.addf %56, %57 : vector<8x256xf32>
    %cst_39 = arith.constant 5.000000e-01 : f32
    %59 = vector.broadcast %cst_39 : f32 to vector<8x256xf32>
    %60 = arith.mulf %59, %58 : vector<8x256xf32>
    %c0_40 = arith.constant 0 : index
    %c0_41 = arith.constant 0 : index
    %61 = vector.load %arg17[%c0_40, %c0_41] : memref<1x256xf32, #tpu.memory_space<vmem>>, vector<1x256xf32>
    %62 = vector.broadcast %61 : vector<1x256xf32> to vector<8x256xf32>
    %63 = arith.mulf %60, %62 : vector<8x256xf32>
    %cst_42 = arith.constant dense<0.000000e+00> : vector<8xf32>
    %64 = vector.multi_reduction <add>, %63, %cst_42 [1] : vector<8x256xf32> to vector<8xf32>
    %65 = vector.shape_cast %64 : vector<8xf32> to vector<8x1xf32>
    %c0_43 = arith.constant 0 : index
    %c0_44 = arith.constant 0 : index
    %66 = vector.load %arg18[%c0_43, %c0_44] : memref<1x1xf32, #tpu.memory_space<vmem>>, vector<1x1xf32>
    %67 = vector.broadcast %66 : vector<1x1xf32> to vector<8x1xf32>
    %68 = arith.addf %65, %67 : vector<8x1xf32>
    %c0_45 = arith.constant 0 : index
    %c0_46 = arith.constant 0 : index
    %69 = vector.load %arg19[%c0_45, %c0_46] : memref<8x1xf32, #tpu.memory_space<vmem>>, vector<8x1xf32>
    tpu.vector_store %arg19[%c0_45, %c0_46], %68 {strides = array<i32>} : memref<8x1xf32, #tpu.memory_space<vmem>>, vector<8x1xf32>,
    %70 = vector.broadcast %61 : vector<1x256xf32> to vector<8x256xf32>
    %71 = arith.mulf %70, %60 : vector<8x256xf32>
    %cst_47 = arith.constant 1.000000e+00 : f32
    %72 = vector.broadcast %cst_47 : f32 to vector<8x256xf32>
    %73 = arith.subf %72, %60 : vector<8x256xf32>
    %74 = arith.mulf %71, %73 : vector<8x256xf32>
    %c0_48 = arith.constant 0 : index
    %c0_49 = arith.constant 0 : index
    %75 = vector.load %arg15[%c0_48, %c0_49] : memref<256x256xf32, #tpu.memory_space<vmem>>, vector<256x256xf32>
    %cst_50 = arith.constant dense<0.000000e+00> : vector<8x256xf32>
    %76 = tpu.matmul %74, %75, %cst_50 {dimension_numbers = #tpu.dot_dimension_numbers<[1], [0], [0], [1], [0, 0, 1, 1], [], []>} : vector<8x256xf32>, vector<256x256xf32>, vector<8x256xf32> -> vector<8x256xf32>
    %77 = arith.mulf %76, %48 : vector<8x256xf32>
    %cst_51 = arith.constant 1.000000e+00 : f32
    %78 = vector.broadcast %cst_51 : f32 to vector<8x256xf32>
    %79 = arith.subf %78, %48 : vector<8x256xf32>
    %80 = arith.mulf %77, %79 : vector<8x256xf32>
    %c0_52 = arith.constant 0 : index
    %c0_53 = arith.constant 0 : index
    %81 = vector.load %arg12[%c0_52, %c0_53] : memref<256x256xf32, #tpu.memory_space<vmem>>, vector<256x256xf32>
    %cst_54 = arith.constant dense<0.000000e+00> : vector<8x256xf32>
    %82 = tpu.matmul %80, %81, %cst_54 {dimension_numbers = #tpu.dot_dimension_numbers<[1], [0], [0], [1], [0, 0, 1, 1], [], []>} : vector<8x256xf32>, vector<256x256xf32>, vector<8x256xf32> -> vector<8x256xf32>
    %83 = arith.mulf %82, %36 : vector<8x256xf32>
    %cst_55 = arith.constant 1.000000e+00 : f32
    %84 = vector.broadcast %cst_55 : f32 to vector<8x256xf32>
    %85 = arith.subf %84, %36 : vector<8x256xf32>
    %86 = arith.mulf %83, %85 : vector<8x256xf32>
    %c0_56 = arith.constant 0 : index
    %c0_57 = arith.constant 0 : index
    %87 = vector.load %arg9[%c0_56, %c0_57] : memref<256x256xf32, #tpu.memory_space<vmem>>, vector<256x256xf32>
    %cst_58 = arith.constant dense<0.000000e+00> : vector<8x256xf32>
    %88 = tpu.matmul %86, %87, %cst_58 {dimension_numbers = #tpu.dot_dimension_numbers<[1], [0], [0], [1], [0, 0, 1, 1], [], []>} : vector<8x256xf32>, vector<256x256xf32>, vector<8x256xf32> -> vector<8x256xf32>
    %89 = arith.mulf %88, %24 : vector<8x256xf32>
    %cst_59 = arith.constant 1.000000e+00 : f32
    %90 = vector.broadcast %cst_59 : f32 to vector<8x256xf32>
    %91 = arith.subf %90, %24 : vector<8x256xf32>
    %92 = arith.mulf %89, %91 : vector<8x256xf32>
    %c0_60 = arith.constant 0 : index
    %c0_61 = arith.constant 0 : index
    %93 = vector.load %arg6[%c0_60, %c0_61] : memref<256x256xf32, #tpu.memory_space<vmem>>, vector<256x256xf32>
    %cst_62 = arith.constant dense<0.000000e+00> : vector<8x256xf32>
    %94 = tpu.matmul %92, %93, %cst_62 {dimension_numbers = #tpu.dot_dimension_numbers<[1], [0], [0], [1], [0, 0, 1, 1], [], []>} : vector<8x256xf32>, vector<256x256xf32>, vector<8x256xf32> -> vector<8x256xf32>
    %95 = arith.mulf %94, %12 : vector<8x256xf32>
    %cst_63 = arith.constant 1.000000e+00 : f32
    %96 = vector.broadcast %cst_63 : f32 to vector<8x256xf32>
    %97 = arith.subf %96, %12 : vector<8x256xf32>
    %98 = arith.mulf %95, %97 : vector<8x256xf32>
    %c0_64 = arith.constant 0 : index
    %c0_65 = arith.constant 0 : index
    %99 = vector.load %arg3[%c0_64, %c0_65] : memref<256x5xf32, #tpu.memory_space<vmem>>, vector<256x5xf32>
    %cst_66 = arith.constant dense<0.000000e+00> : vector<8x5xf32>
    %100 = tpu.matmul %98, %99, %cst_66 {dimension_numbers = #tpu.dot_dimension_numbers<[1], [0], [0], [1], [0, 0, 1, 1], [], []>} : vector<8x256xf32>, vector<256x5xf32>, vector<8x5xf32> -> vector<8x5xf32>
    %101 = vector.extract_strided_slice %100 {offsets = [0, 1], sizes = [8, 4], strides = [1, 1]} : vector<8x5xf32> to vector<8x4xf32>
    %c0_67 = arith.constant 0 : index
    %c0_68 = arith.constant 0 : index
    %102 = vector.load %arg20[%c0_67, %c0_68] : memref<8x4xf32, #tpu.memory_space<vmem>>, vector<8x4xf32>
    tpu.vector_store %arg20[%c0_67, %c0_68], %101 {strides = array<i32>} : memref<8x4xf32, #tpu.memory_space<vmem>>, vector<8x4xf32>,
    return
  }
  func.func @transform_0(%arg0: i32) -> (i32, i32) {
    %c0_i32 = arith.constant 0 : i32
    %c0_i32_0 = arith.constant 0 : i32
    return %arg0, %c0_i32 : i32, i32
  }
  func.func @transform_1(%arg0: i32) -> (i32, i32) {
    %c0_i32 = arith.constant 0 : i32
    %c0_i32_0 = arith.constant 0 : i32
    %c0_i32_1 = arith.constant 0 : i32
    return %c0_i32, %c0_i32_0 : i32, i32
  }
  func.func @transform_2(%arg0: i32) -> (i32, i32) {
    %c0_i32 = arith.constant 0 : i32
    %c0_i32_0 = arith.constant 0 : i32
    %c0_i32_1 = arith.constant 0 : i32
    return %c0_i32, %c0_i32_0 : i32, i32
  }
  func.func @transform_3(%arg0: i32) -> (i32, i32) {
    %c0_i32 = arith.constant 0 : i32
    %c0_i32_0 = arith.constant 0 : i32
    %c0_i32_1 = arith.constant 0 : i32
    return %c0_i32, %c0_i32_0 : i32, i32
  }
  func.func @transform_4(%arg0: i32) -> (i32, i32) {
    %c0_i32 = arith.constant 0 : i32
    %c0_i32_0 = arith.constant 0 : i32
    %c0_i32_1 = arith.constant 0 : i32
    return %c0_i32, %c0_i32_0 : i32, i32
  }
  func.func @transform_5(%arg0: i32) -> (i32, i32) {
    %c0_i32 = arith.constant 0 : i32
    %c0_i32_0 = arith.constant 0 : i32
    %c0_i32_1 = arith.constant 0 : i32
    return %c0_i32, %c0_i32_0 : i32, i32
  }
  func.func @transform_6(%arg0: i32) -> (i32, i32) {
    %c0_i32 = arith.constant 0 : i32
    %c0_i32_0 = arith.constant 0 : i32
    %c0_i32_1 = arith.constant 0 : i32
    return %c0_i32, %c0_i32_0 : i32, i32
  }
  func.func @transform_7(%arg0: i32) -> (i32, i32) {
    %c0_i32 = arith.constant 0 : i32
    %c0_i32_0 = arith.constant 0 : i32
    %c0_i32_1 = arith.constant 0 : i32
    return %c0_i32, %c0_i32_0 : i32, i32
  }
  func.func @transform_8(%arg0: i32) -> (i32, i32) {
    %c0_i32 = arith.constant 0 : i32
    %c0_i32_0 = arith.constant 0 : i32
    %c0_i32_1 = arith.constant 0 : i32
    return %c0_i32, %c0_i32_0 : i32, i32
  }
  func.func @transform_9(%arg0: i32) -> (i32, i32) {
    %c0_i32 = arith.constant 0 : i32
    %c0_i32_0 = arith.constant 0 : i32
    %c0_i32_1 = arith.constant 0 : i32
    return %c0_i32, %c0_i32_0 : i32, i32
  }
  func.func @transform_10(%arg0: i32) -> (i32, i32) {
    %c0_i32 = arith.constant 0 : i32
    %c0_i32_0 = arith.constant 0 : i32
    %c0_i32_1 = arith.constant 0 : i32
    return %c0_i32, %c0_i32_0 : i32, i32
  }
  func.func @transform_11(%arg0: i32) -> (i32, i32) {
    %c0_i32 = arith.constant 0 : i32
    %c0_i32_0 = arith.constant 0 : i32
    %c0_i32_1 = arith.constant 0 : i32
    return %c0_i32, %c0_i32_0 : i32, i32
  }
  func.func @transform_12(%arg0: i32) -> (i32, i32) {
    %c0_i32 = arith.constant 0 : i32
    %c0_i32_0 = arith.constant 0 : i32
    %c0_i32_1 = arith.constant 0 : i32
    return %c0_i32, %c0_i32_0 : i32, i32
  }
  func.func @transform_13(%arg0: i32) -> (i32, i32) {
    %c0_i32 = arith.constant 0 : i32
    %c0_i32_0 = arith.constant 0 : i32
    %c0_i32_1 = arith.constant 0 : i32
    return %c0_i32, %c0_i32_0 : i32, i32
  }
  func.func @transform_14(%arg0: i32) -> (i32, i32) {
    %c0_i32 = arith.constant 0 : i32
    %c0_i32_0 = arith.constant 0 : i32
    %c0_i32_1 = arith.constant 0 : i32
    return %c0_i32, %c0_i32_0 : i32, i32
  }
  func.func @transform_15(%arg0: i32) -> (i32, i32) {
    %c0_i32 = arith.constant 0 : i32
    %c0_i32_0 = arith.constant 0 : i32
    %c0_i32_1 = arith.constant 0 : i32
    return %c0_i32, %c0_i32_0 : i32, i32
  }
  func.func @transform_16(%arg0: i32) -> (i32, i32) {
    %c0_i32 = arith.constant 0 : i32
    %c0_i32_0 = arith.constant 0 : i32
    %c0_i32_1 = arith.constant 0 : i32
    return %c0_i32, %c0_i32_0 : i32, i32
  }
  func.func @transform_17(%arg0: i32) -> (i32, i32) {
    %c0_i32 = arith.constant 0 : i32
    %c0_i32_0 = arith.constant 0 : i32
    %c0_i32_1 = arith.constant 0 : i32
    return %c0_i32, %c0_i32_0 : i32, i32
  }
  func.func @transform_18(%arg0: i32) -> (i32, i32) {
    %c0_i32 = arith.constant 0 : i32
    %c0_i32_0 = arith.constant 0 : i32
    return %arg0, %c0_i32 : i32, i32
  }
  func.func @transform_19(%arg0: i32) -> (i32, i32) {
    %c0_i32 = arith.constant 0 : i32
    %c0_i32_0 = arith.constant 0 : i32
    return %arg0, %c0_i32 : i32, i32
  }
}

</mosaic_0001>

<llo_original>
// kernel: tpu_custom_call.1
$region0: #{tpu_custom_call.1}
  #allocation0 [shape = 'u32[]', space=smem, size = 0x4, offset = 0x4, fixed_abs, tag = 'smem constant byte address 0x4 - core index']
  #allocation1 [shape = 'u32[144,128]{1,0:T(1,128)}', space=vmem, size = 0x12000, scoped, tag = 'internal scratch']
  #allocation2 [shape = 'f32[1,1]{1,0:T(1,128)S(1)}', space=vmem, size = 0x200, scoped, tag = 'scoped memory for tpu_custom_call.1']
  %s0 = inlined_call_operand.vmem [shape: f32[8,5], index: 0, kind: input, shape index: {}]
  %s1 = inlined_call_operand.vmem [shape: f32[5,256], index: 1, kind: input, shape index: {}]
  %s2 = inlined_call_operand.vmem [shape: f32[256,5], index: 2, kind: input, shape index: {}]
  %s3 = inlined_call_operand.vmem [shape: f32[1,256], index: 3, kind: input, shape index: {}]
  %s4 = inlined_call_operand.hbm [shape: f32[256,256], index: 4, kind: input, shape index: {}]
  %s5 = inlined_call_operand.hbm [shape: f32[256,256], index: 5, kind: input, shape index: {}]
  %s6 = inlined_call_operand.vmem [shape: f32[1,256], index: 6, kind: input, shape index: {}]
  %s7 = inlined_call_operand.hbm [shape: f32[256,256], index: 7, kind: input, shape index: {}]
  %s8 = inlined_call_operand.hbm [shape: f32[256,256], index: 8, kind: input, shape index: {}]
  %s9 = inlined_call_operand.vmem [shape: f32[1,256], index: 9, kind: input, shape index: {}]
  %s10 = inlined_call_operand.hbm [shape: f32[256,256], index: 10, kind: input, shape index: {}]
  %s11 = inlined_call_operand.hbm [shape: f32[256,256], index: 11, kind: input, shape index: {}]
  %s12 = inlined_call_operand.vmem [shape: f32[1,256], index: 12, kind: input, shape index: {}]
  %s13 = inlined_call_operand.hbm [shape: f32[256,256], index: 13, kind: input, shape index: {}]
  %s14 = inlined_call_operand.hbm [shape: f32[256,256], index: 14, kind: input, shape index: {}]
  %s15 = inlined_call_operand.vmem [shape: f32[1,256], index: 15, kind: input, shape index: {}]
  %s16 = inlined_call_operand.vmem [shape: f32[1,256], index: 16, kind: input, shape index: {}]
  %s17 = inlined_call_operand.<no memory space> [shape: f32[1,1], index: 17, kind: input, shape index: {}]
  %s18 = inlined_call_operand.vmem [shape: f32[8,1], index: 18, kind: output, shape index: {0}]
  %s19 = inlined_call_operand.vmem [shape: f32[8,4], index: 19, kind: output, shape index: {1}]
  %20 = xla_tuple %s18, %s19
  %s21 = sld [smem:[#allocation0]]
  $region122: #{tpu_custom_call.1} parent=0
    _
  %s23 = ssub.s32 1, %s21
  %s24 = scalar_select 0, %s23, %s21
  %v25 = vstv %s17
  %26 = vst [vmem:[#allocation2] sm:$0x1] %v25
  $region1: #{tpu_custom_call.1} parent=0
    #allocation3 [shape = 'u8[262144]{0}', space=vmem, size = 0x40000, scoped, tag = 'input window, operand 4, single buffered']
    #allocation4 [shape = 's32[1]{0}', space=sflag, size = 0x4, scoped, tag = 'scoped memory for tpu_custom_call.1']
    #allocation5 [shape = 'u8[262144]{0}', space=vmem, size = 0x40000, scoped, tag = 'input window, operand 5, single buffered']
    #allocation6 [shape = 's32[1]{0}', space=sflag, size = 0x4, scoped, tag = 'scoped memory for tpu_custom_call.1']
    #allocation7 [shape = 'u8[262144]{0}', space=vmem, size = 0x40000, scoped, tag = 'input window, operand 7, single buffered']
    #allocation8 [shape = 'u8[262144]{0}', space=vmem, size = 0x40000, scoped, tag = 'input window, operand 8, single buffered']
    #allocation9 [shape = 's32[1]{0}', space=sflag, size = 0x4, scoped, tag = 'scoped memory for tpu_custom_call.1']
    #allocation10 [shape = 'u8[262144]{0}', space=vmem, size = 0x40000, scoped, tag = 'input window, operand 10, single buffered']
    #allocation11 [shape = 'u8[262144]{0}', space=vmem, size = 0x40000, scoped, tag = 'input window, operand 11, single buffered']
    #allocation12 [shape = 's32[1]{0}', space=sflag, size = 0x4, scoped, tag = 'scoped memory for tpu_custom_call.1']
    #allocation13 [shape = 'u8[262144]{0}', space=vmem, size = 0x40000, scoped, tag = 'input window, operand 13, single buffered']
    #allocation14 [shape = 'u8[262144]{0}', space=vmem, size = 0x40000, scoped, tag = 'input window, operand 14, single buffered']
    #allocation15 [shape = 's32[1]{0}', space=sflag, size = 0x4, scoped, tag = 'scoped memory for tpu_custom_call.1']
    %27 = vsyncpa [#allocation4], 0
    %28 = vsyncpa [#allocation6], 0
    %29 = vsyncpa [#allocation9], 0
    %30 = vsyncpa [#allocation12], 0
    %31 = vsyncpa [#allocation15], 0
    // Predicated region
    $region2: #{tpu_custom_call.1} parent=1 // pred_check
      _
    $region3: #{tpu_custom_call.1} parent=1 // pred_check_branch
      %33 = sbr.rel (0) target = $region5
    $region4: #{tpu_custom_call.1} parent=1 // pred_region
      _
    $region5: #{tpu_custom_call.1} parent=1 // pred_fallthru
      _
    // Predicated region
    $region6: #{tpu_custom_call.1} parent=1 // pred_check
      _
    $region7: #{tpu_custom_call.1} parent=1 // pred_check_branch
      %35 = sbr.rel (0) target = $region9
    $region8: #{tpu_custom_call.1} parent=1 // pred_region
      _
    $region9: #{tpu_custom_call.1} parent=1 // pred_fallthru
      _
    // Predicated region
    $region10: #{tpu_custom_call.1} parent=1 // pred_check
      _
    $region11: #{tpu_custom_call.1} parent=1 // pred_check_branch
      %37 = sbr.rel (0) target = $region13
    $region12: #{tpu_custom_call.1} parent=1 // pred_region
      _
    $region13: #{tpu_custom_call.1} parent=1 // pred_fallthru
      _
    // Predicated region
    $region14: #{tpu_custom_call.1} parent=1 // pred_check
      _
    $region15: #{tpu_custom_call.1} parent=1 // pred_check_branch
      %39 = sbr.rel (0) target = $region17
    $region16: #{tpu_custom_call.1} parent=1 // pred_region
      _
    $region17: #{tpu_custom_call.1} parent=1 // pred_fallthru
      _
    // Predicated region
    $region18: #{tpu_custom_call.1} parent=1 // pred_check
      _
    $region19: #{tpu_custom_call.1} parent=1 // pred_check_branch
      %41 = sbr.rel (0) target = $region21
    $region20: #{tpu_custom_call.1} parent=1 // pred_region
      %s43 = ssub.s32 8192, 8192
      %44 = vsyncadd [#allocation4], %s43
      %s45 = sshll.u32 [#allocation3], 4
      %s46 = int_to_ptr.vmem [resolvable:$true] %s45
      %51 = dma.hbm_to_vmem [thread:$0]  %s4, 8192, %s46, [#allocation4], 256, 256, 16
    $region21: #{tpu_custom_call.1} parent=1 // pred_fallthru
      _
    // Predicated region
    $region22: #{tpu_custom_call.1} parent=1 // pred_check
      _
    $region23: #{tpu_custom_call.1} parent=1 // pred_check_branch
      %53 = sbr.rel (0) target = $region25
    $region24: #{tpu_custom_call.1} parent=1 // pred_region
      %s55 = ssub.s32 8192, 8192
      %56 = vsyncadd [#allocation6], %s55
      %s57 = sshll.u32 [#allocation5], 4
      %s58 = int_to_ptr.vmem [resolvable:$true] %s57
      %63 = dma.hbm_to_vmem [thread:$0]  %s5, 8192, %s58, [#allocation6], 256, 256, 16
    $region25: #{tpu_custom_call.1} parent=1 // pred_fallthru
      _
    // Predicated region
    $region26: #{tpu_custom_call.1} parent=1 // pred_check
      _
    $region27: #{tpu_custom_call.1} parent=1 // pred_check_branch
      %65 = sbr.rel (0) target = $region29
    $region28: #{tpu_custom_call.1} parent=1 // pred_region
      _
    $region29: #{tpu_custom_call.1} parent=1 // pred_fallthru
      _
    // Predicated region
    $region30: #{tpu_custom_call.1} parent=1 // pred_check
      _
    $region31: #{tpu_custom_call.1} parent=1 // pred_check_branch
      %67 = sbr.rel (0) target = $region33
    $region32: #{tpu_custom_call.1} parent=1 // pred_region
      %s69 = ssub.s32 8192, 8192
      %70 = vsyncadd [#allocation6], %s69
      %s71 = sshll.u32 [#allocation7], 4
      %s72 = int_to_ptr.vmem [resolvable:$true] %s71
      %77 = dma.hbm_to_vmem [thread:$0]  %s7, 8192, %s72, [#allocation6], 256, 256, 16
    $region33: #{tpu_custom_call.1} parent=1 // pred_fallthru
      _
    // Predicated region
    $region34: #{tpu_custom_call.1} parent=1 // pred_check
      _
    $region35: #{tpu_custom_call.1} parent=1 // pred_check_branch
      %79 = sbr.rel (0) target = $region37
    $region36: #{tpu_custom_call.1} parent=1 // pred_region
      %s81 = ssub.s32 8192, 8192
      %82 = vsyncadd [#allocation9], %s81
      %s83 = sshll.u32 [#allocation8], 4
      %s84 = int_to_ptr.vmem [resolvable:$true] %s83
      %89 = dma.hbm_to_vmem [thread:$0]  %s8, 8192, %s84, [#allocation9], 256, 256, 16
    $region37: #{tpu_custom_call.1} parent=1 // pred_fallthru
      _
    // Predicated region
    $region38: #{tpu_custom_call.1} parent=1 // pred_check
      _
    $region39: #{tpu_custom_call.1} parent=1 // pred_check_branch
      %91 = sbr.rel (0) target = $region41
    $region40: #{tpu_custom_call.1} parent=1 // pred_region
      _
    $region41: #{tpu_custom_call.1} parent=1 // pred_fallthru
      _
    // Predicated region
    $region42: #{tpu_custom_call.1} parent=1 // pred_check
      _
    $region43: #{tpu_custom_call.1} parent=1 // pred_check_branch
      %93 = sbr.rel (0) target = $region45
    $region44: #{tpu_custom_call.1} parent=1 // pred_region
      %s95 = ssub.s32 8192, 8192
      %96 = vsyncadd [#allocation9], %s95
      %s97 = sshll.u32 [#allocation10], 4
      %s98 = int_to_ptr.vmem [resolvable:$true] %s97
      %103 = dma.hbm_to_vmem [thread:$0]  %s10, 8192, %s98, [#allocation9], 256, 256, 16
    $region45: #{tpu_custom_call.1} parent=1 // pred_fallthru
      _
    // Predicated region
    $region46: #{tpu_custom_call.1} parent=1 // pred_check
      _
    $region47: #{tpu_custom_call.1} parent=1 // pred_check_branch
      %105 = sbr.rel (0) target = $region49
    $region48: #{tpu_custom_call.1} parent=1 // pred_region
      %s107 = ssub.s32 8192, 8192
      %108 = vsyncadd [#allocation12], %s107
      %s109 = sshll.u32 [#allocation11], 4
      %s110 = int_to_ptr.vmem [resolvable:$true] %s109
      %115 = dma.hbm_to_vmem [thread:$0]  %s11, 8192, %s110, [#allocation12], 256, 256, 16
    $region49: #{tpu_custom_call.1} parent=1 // pred_fallthru
      _
    // Predicated region
    $region50: #{tpu_custom_call.1} parent=1 // pred_check
      _
    $region51: #{tpu_custom_call.1} parent=1 // pred_check_branch
      %117 = sbr.rel (0) target = $region53
    $region52: #{tpu_custom_call.1} parent=1 // pred_region
      _
    $region53: #{tpu_custom_call.1} parent=1 // pred_fallthru
      _
    // Predicated region
    $region54: #{tpu_custom_call.1} parent=1 // pred_check
      _
    $region55: #{tpu_custom_call.1} parent=1 // pred_check_branch
      %119 = sbr.rel (0) target = $region57
    $region56: #{tpu_custom_call.1} parent=1 // pred_region
      %s121 = ssub.s32 8192, 8192
      %122 = vsyncadd [#allocation12], %s121
      %s123 = sshll.u32 [#allocation13], 4
      %s124 = int_to_ptr.vmem [resolvable:$true] %s123
      %129 = dma.hbm_to_vmem [thread:$0]  %s13, 8192, %s124, [#allocation12], 256, 256, 16
    $region57: #{tpu_custom_call.1} parent=1 // pred_fallthru
      _
    // Predicated region
    $region58: #{tpu_custom_call.1} parent=1 // pred_check
      _
    $region59: #{tpu_custom_call.1} parent=1 // pred_check_branch
      %131 = sbr.rel (0) target = $region61
    $region60: #{tpu_custom_call.1} parent=1 // pred_region
      %s133 = ssub.s32 8192, 8192
      %134 = vsyncadd [#allocation15], %s133
      %s135 = sshll.u32 [#allocation14], 4
      %s136 = int_to_ptr.vmem [resolvable:$true] %s135
      %141 = dma.hbm_to_vmem [thread:$0]  %s14, 8192, %s136, [#allocation15], 256, 256, 16
    $region61: #{tpu_custom_call.1} parent=1 // pred_fallthru
      _
    // Predicated region
    $region62: #{tpu_custom_call.1} parent=1 // pred_check
      _
    $region63: #{tpu_custom_call.1} parent=1 // pred_check_branch
      %143 = sbr.rel (0) target = $region65
    $region64: #{tpu_custom_call.1} parent=1 // pred_region
      _
    $region65: #{tpu_custom_call.1} parent=1 // pred_fallthru
      _
    // Predicated region
    $region66: #{tpu_custom_call.1} parent=1 // pred_check
      _
    $region67: #{tpu_custom_call.1} parent=1 // pred_check_branch
      %145 = sbr.rel (0) target = $region69
    $region68: #{tpu_custom_call.1} parent=1 // pred_region
      _
    $region69: #{tpu_custom_call.1} parent=1 // pred_fallthru
      _
    // Predicated region
    $region70: #{tpu_custom_call.1} parent=1 // pred_check
      _
    $region71: #{tpu_custom_call.1} parent=1 // pred_check_branch
      %147 = sbr.rel (0) target = $region73
    $region72: #{tpu_custom_call.1} parent=1 // pred_region
      _
    $region73: #{tpu_custom_call.1} parent=1 // pred_fallthru
      _
    // Predicated region
    $region74: #{tpu_custom_call.1} parent=1 // pred_check
      _
    $region75: #{tpu_custom_call.1} parent=1 // pred_check_branch
      %149 = sbr.rel (0) target = $region77
    $region76: #{tpu_custom_call.1} parent=1 // pred_region
      %150 = dma.done [#allocation4], 8192
    $region77: #{tpu_custom_call.1} parent=1 // pred_fallthru
      _
    // Predicated region
    $region78: #{tpu_custom_call.1} parent=1 // pred_check
      _
    $region79: #{tpu_custom_call.1} parent=1 // pred_check_branch
      %152 = sbr.rel (0) target = $region81
    $region80: #{tpu_custom_call.1} parent=1 // pred_region
      %153 = dma.done [#allocation6], 8192
    $region81: #{tpu_custom_call.1} parent=1 // pred_fallthru
      _
    // Predicated region
    $region82: #{tpu_custom_call.1} parent=1 // pred_check
      _
    $region83: #{tpu_custom_call.1} parent=1 // pred_check_branch
      %155 = sbr.rel (0) target = $region85
    $region84: #{tpu_custom_call.1} parent=1 // pred_region
      %156 = dma.done [#allocation6], 8192
    $region85: #{tpu_custom_call.1} parent=1 // pred_fallthru
      _
    // Predicated region
    $region86: #{tpu_custom_call.1} parent=1 // pred_check
      _
    $region87: #{tpu_custom_call.1} parent=1 // pred_check_branch
      %158 = sbr.rel (0) target = $region89
    $region88: #{tpu_custom_call.1} parent=1 // pred_region
      %159 = dma.done [#allocation9], 8192
    $region89: #{tpu_custom_call.1} parent=1 // pred_fallthru
      _
    // Predicated region
    $region90: #{tpu_custom_call.1} parent=1 // pred_check
      _
    $region91: #{tpu_custom_call.1} parent=1 // pred_check_branch
      %161 = sbr.rel (0) target = $region93
    $region92: #{tpu_custom_call.1} parent=1 // pred_region
      %162 = dma.done [#allocation9], 8192
    $region93: #{tpu_custom_call.1} parent=1 // pred_fallthru
      _
    // Predicated region
    $region94: #{tpu_custom_call.1} parent=1 // pred_check
      _
    $region95: #{tpu_custom_call.1} parent=1 // pred_check_branch
      %164 = sbr.rel (0) target = $region97
    $region96: #{tpu_custom_call.1} parent=1 // pred_region
      %165 = dma.done [#allocation12], 8192
    $region97: #{tpu_custom_call.1} parent=1 // pred_fallthru
      _
    // Predicated region
    $region98: #{tpu_custom_call.1} parent=1 // pred_check
      _
    $region99: #{tpu_custom_call.1} parent=1 // pred_check_branch
      %167 = sbr.rel (0) target = $region101
    $region100: #{tpu_custom_call.1} parent=1 // pred_region
      %168 = dma.done [#allocation12], 8192
    $region101: #{tpu_custom_call.1} parent=1 // pred_fallthru
      _
    // Predicated region
    $region102: #{tpu_custom_call.1} parent=1 // pred_check
      _
    $region103: #{tpu_custom_call.1} parent=1 // pred_check_branch
      %170 = sbr.rel (0) target = $region105
    $region104: #{tpu_custom_call.1} parent=1 // pred_region
      %171 = dma.done [#allocation15], 8192
    $region105: #{tpu_custom_call.1} parent=1 // pred_fallthru
      _
    %v172 = vld [vmem:[%s0] sm:$0xff]
    %v173 = vld [vmem:[%s1] sm:$0x1f]
    %v174 = vld [vmem:[%s1 + $0x8] sm:$0x1f]
    %v175 = vld [vmem:[%s3] sm:$0x3]
    %v177 = vlaneseq
    %v178 = vshrl.u32 %v177, 7
    %v179 = vsub.s32 0, %v178
    %v180 = vrot.slane %v175, %v179
    %v181 = vlaneseq
    %v182 = vshrl.u32 %v181, 7
    %v183 = vsub.s32 1, %v182
    %v184 = vrot.slane %v175, %v183
    %vm187 = vcmask 39936
    %v189 = vsel %vm187, %v172, 0
    %vm191 = vcmask 1044480
    %v193 = vsel %vm191, %v173, 0
    %v196 = vsel %vm191, %v174, 0
    %198 = vmatprep.subr.mxu0 %v196
    %199 = vmatpush1.msra.mxu0 %v193
    %200 = vmatprep.subr.mxu0 0.0
    %201 = vmatpush1.msra.mxu0 0.0
    %202 = vmatprep.subr.mxu0 0.0
    %203 = vmatpush1.msra.mxu0 0.0
    %204 = vmatprep.subr.mxu0 0.0
    %205 = vmatpush1.msra.mxu0 0.0
    %206 = vmatprep.subr.mxu0 0.0
    %207 = vmatpush1.msra.mxu0 0.0
    %208 = vmatprep.subr.mxu0 0.0
    %209 = vmatpush1.msra.mxu0 0.0
    %210 = vmatprep.subr.mxu0 0.0
    %211 = vmatpush1.msra.mxu0 0.0
    %212 = vmatprep.subr.mxu0 0.0
    %213 = vmatpush1.msra.mxu0 0.0
    %214 = vmatprep.subr.mxu0 0.0
    %215 = vmatpush1.msra.mxu0 0.0
    %216 = vmatprep.subr.mxu0 0.0
    %217 = vmatpush1.msra.mxu0 0.0
    %218 = vmatprep.subr.mxu0 0.0
    %219 = vmatpush1.msra.mxu0 0.0
    %220 = vmatprep.subr.mxu0 0.0
    %221 = vmatpush1.msra.mxu0 0.0
    %222 = vmatprep.subr.mxu0 0.0
    %223 = vmatpush1.msra.mxu0 0.0
    %224 = vmatprep.subr.mxu0 0.0
    %225 = vmatpush1.msra.mxu0 0.0
    %226 = vmatprep.subr.mxu0 0.0
    %227 = vmatpush1.msra.mxu0 0.0
    %228 = vmatprep.subr.mxu0 0.0
    %229 = vmatpush1.msra.mxu0 0.0
    %230 = vmatprep.subr.mxu0 0.0
    %231 = vmatpush1.msra.mxu0 0.0
    %232 = vmatprep.subr.mxu0 0.0
    %233 = vmatpush1.msra.mxu0 0.0
    %234 = vmatprep.subr.mxu0 0.0
    %235 = vmatpush1.msra.mxu0 0.0
    %236 = vmatprep.subr.mxu0 0.0
    %237 = vmatpush1.msra.mxu0 0.0
    %238 = vmatprep.subr.mxu0 0.0
    %239 = vmatpush1.msra.mxu0 0.0
    %240 = vmatprep.subr.mxu0 0.0
    %241 = vmatpush1.msra.mxu0 0.0
    %242 = vmatprep.subr.mxu0 0.0
    %243 = vmatpush1.msra.mxu0 0.0
    %244 = vmatprep.subr.mxu0 0.0
    %245 = vmatpush1.msra.mxu0 0.0
    %246 = vmatprep.subr.mxu0 0.0
    %247 = vmatpush1.msra.mxu0 0.0
    %248 = vmatprep.subr.mxu0 0.0
    %249 = vmatpush1.msra.mxu0 0.0
    %250 = vmatprep.subr.mxu0 0.0
    %251 = vmatpush1.msra.mxu0 0.0
    %252 = vmatprep.subr.mxu0 0.0
    %253 = vmatpush1.msra.mxu0 0.0
    %254 = vmatprep.subr.mxu0 0.0
    %255 = vmatpush1.msra.mxu0 0.0
    %256 = vmatprep.subr.mxu0 0.0
    %257 = vmatpush1.msra.mxu0 0.0
    %258 = vmatprep.subr.mxu0 0.0
    %259 = vmatpush1.msra.mxu0 0.0
    %260 = vmatprep.subr.mxu0 0.0
    %261 = vmatpush1.msra.mxu0 0.0
    %262 = vmatprep.mubr.f32.mxu0 0.0
    %263 = vmatmul.mubr.f32.gmra.mrb[0].mxu0 %v189
    %v264 = vpop.f32.mrb[0].mxu0
    %v265 = vadd.f32 %v180, %v264
    %v266 = vpop.f32.mrb[0].mxu0
    %v267 = vadd.f32 %v184, %v266
    %268 = vdwg.mxu0
    %v269 = vmul.f32 %v265, 0.5
    %v270 = vmul.f32 %v267, 0.5
    %v271 = vtanh.pop %v269
    %v272 = vtanh.pop %v270
    %v273 = vadd.f32 %v271, 1.0
    %v274 = vadd.f32 %v272, 1.0
    %v275 = vmul.f32 %v273, 0.5
    %v276 = vmul.f32 %v274, 0.5
    %v277 = vld [vmem:[#allocation3] sm:$0xff]
    %v278 = vld [vmem:[#allocation3 + $0x8] sm:$0xff]
    %v279 = vld [vmem:[#allocation3 + $0x10] sm:$0xff]
    %v280 = vld [vmem:[#allocation3 + $0x18] sm:$0xff]
    %v281 = vld [vmem:[#allocation3 + $0x20] sm:$0xff]
    %v282 = vld [vmem:[#allocation3 + $0x28] sm:$0xff]
    %v283 = vld [vmem:[#allocation3 + $0x30] sm:$0xff]
    %v284 = vld [vmem:[#allocation3 + $0x38] sm:$0xff]
    %v285 = vld [vmem:[#allocation3 + $0x40] sm:$0xff]
    %v286 = vld [vmem:[#allocation3 + $0x48] sm:$0xff]
    %v287 = vld [vmem:[#allocation3 + $0x50] sm:$0xff]
    %v288 = vld [vmem:[#allocation3 + $0x58] sm:$0xff]
    %v289 = vld [vmem:[#allocation3 + $0x60] sm:$0xff]
    %v290 = vld [vmem:[#allocation3 + $0x68] sm:$0xff]
    %v291 = vld [vmem:[#allocation3 + $0x70] sm:$0xff]
    %v292 = vld [vmem:[#allocation3 + $0x78] sm:$0xff]
    %v293 = vld [vmem:[#allocation3 + $0x80] sm:$0xff]
    %v294 = vld [vmem:[#allocation3 + $0x88] sm:$0xff]
    %v295 = vld [vmem:[#allocation3 + $0x90] sm:$0xff]
    %v296 = vld [vmem:[#allocation3 + $0x98] sm:$0xff]
    %v297 = vld [vmem:[#allocation3 + $0xa0] sm:$0xff]
    %v298 = vld [vmem:[#allocation3 + $0xa8] sm:$0xff]
    %v299 = vld [vmem:[#allocation3 + $0xb0] sm:$0xff]
    %v300 = vld [vmem:[#allocation3 + $0xb8] sm:$0xff]
    %v301 = vld [vmem:[#allocation3 + $0xc0] sm:$0xff]
    %v302 = vld [vmem:[#allocation3 + $0xc8] sm:$0xff]
    %v303 = vld [vmem:[#allocation3 + $0xd0] sm:$0xff]
    %v304 = vld [vmem:[#allocation3 + $0xd8] sm:$0xff]
    %v305 = vld [vmem:[#allocation3 + $0xe0] sm:$0xff]
    %v306 = vld [vmem:[#allocation3 + $0xe8] sm:$0xff]
    %v307 = vld [vmem:[#allocation3 + $0xf0] sm:$0xff]
    %v308 = vld [vmem:[#allocation3 + $0xf8] sm:$0xff]
    %v309 = vld [vmem:[#allocation3 + $0x100] sm:$0xff]
    %v310 = vld [vmem:[#allocation3 + $0x108] sm:$0xff]
    %v311 = vld [vmem:[#allocation3 + $0x110] sm:$0xff]
    %v312 = vld [vmem:[#allocation3 + $0x118] sm:$0xff]
    %v313 = vld [vmem:[#allocation3 + $0x120] sm:$0xff]
    %v314 = vld [vmem:[#allocation3 + $0x128] sm:$0xff]
    %v315 = vld [vmem:[#allocation3 + $0x130] sm:$0xff]
    %v316 = vld [vmem:[#allocation3 + $0x138] sm:$0xff]
    %v317 = vld [vmem:[#allocation3 + $0x140] sm:$0xff]
    %v318 = vld [vmem:[#allocation3 + $0x148] sm:$0xff]
    %v319 = vld [vmem:[#allocation3 + $0x150] sm:$0xff]
    %v320 = vld [vmem:[#allocation3 + $0x158] sm:$0xff]
    %v321 = vld [vmem:[#allocation3 + $0x160] sm:$0xff]
    %v322 = vld [vmem:[#allocation3 + $0x168] sm:$0xff]
    %v323 = vld [vmem:[#allocation3 + $0x170] sm:$0xff]
    %v324 = vld [vmem:[#allocation3 + $0x178] sm:$0xff]
    %v325 = vld [vmem:[#allocation3 + $0x180] sm:$0xff]
    %v326 = vld [vmem:[#allocation3 + $0x188] sm:$0xff]
    %v327 = vld [vmem:[#allocation3 + $0x190] sm:$0xff]
    %v328 = vld [vmem:[#allocation3 + $0x198] sm:$0xff]
    %v329 = vld [vmem:[#allocation3 + $0x1a0] sm:$0xff]
    %v330 = vld [vmem:[#allocation3 + $0x1a8] sm:$0xff]
    %v331 = vld [vmem:[#allocation3 + $0x1b0] sm:$0xff]
    %v332 = vld [vmem:[#allocation3 + $0x1b8] sm:$0xff]
    %v333 = vld [vmem:[#allocation3 + $0x1c0] sm:$0xff]
    %v334 = vld [vmem:[#allocation3 + $0x1c8] sm:$0xff]
    %v335 = vld [vmem:[#allocation3 + $0x1d0] sm:$0xff]
    %v336 = vld [vmem:[#allocation3 + $0x1d8] sm:$0xff]
    %v337 = vld [vmem:[#allocation3 + $0x1e0] sm:$0xff]
    %v338 = vld [vmem:[#allocation3 + $0x1e8] sm:$0xff]
    %v339 = vld [vmem:[#allocation3 + $0x1f0] sm:$0xff]
    %v340 = vld [vmem:[#allocation3 + $0x1f8] sm:$0xff]
    %v341 = vld [vmem:[%s6] sm:$0x3]
    %v343 = vlaneseq
    %v344 = vshrl.u32 %v343, 7
    %v345 = vsub.s32 0, %v344
    %v346 = vrot.slane %v341, %v345
    %v347 = vlaneseq
    %v348 = vshrl.u32 %v347, 7
    %v349 = vsub.s32 1, %v348
    %v350 = vrot.slane %v341, %v349
    %353 = vmatprep.subr.mxu0 %v278
    %354 = vmatpush1.msra.mxu0 %v277
    %355 = vmatprep.subr.mxu0 %v280
    %356 = vmatpush1.msra.mxu0 %v279
    %357 = vmatprep.subr.mxu0 %v282
    %358 = vmatpush1.msra.mxu0 %v281
    %359 = vmatprep.subr.mxu0 %v284
    %360 = vmatpush1.msra.mxu0 %v283
    %361 = vmatprep.subr.mxu0 %v286
    %362 = vmatpush1.msra.mxu0 %v285
    %363 = vmatprep.subr.mxu0 %v288
    %364 = vmatpush1.msra.mxu0 %v287
    %365 = vmatprep.subr.mxu0 %v290
    %366 = vmatpush1.msra.mxu0 %v289
    %367 = vmatprep.subr.mxu0 %v292
    %368 = vmatpush1.msra.mxu0 %v291
    %369 = vmatprep.subr.mxu0 %v294
    %370 = vmatpush1.msra.mxu0 %v293
    %371 = vmatprep.subr.mxu0 %v296
    %372 = vmatpush1.msra.mxu0 %v295
    %373 = vmatprep.subr.mxu0 %v298
    %374 = vmatpush1.msra.mxu0 %v297
    %375 = vmatprep.subr.mxu0 %v300
    %376 = vmatpush1.msra.mxu0 %v299
    %377 = vmatprep.subr.mxu0 %v302
    %378 = vmatpush1.msra.mxu0 %v301
    %379 = vmatprep.subr.mxu0 %v304
    %380 = vmatpush1.msra.mxu0 %v303
    %381 = vmatprep.subr.mxu0 %v306
    %382 = vmatpush1.msra.mxu0 %v305
    %383 = vmatprep.subr.mxu0 %v308
    %384 = vmatpush1.msra.mxu0 %v307
    %385 = vmatprep.subr.mxu0 %v310
    %386 = vmatpush1.msra.mxu0 %v309
    %387 = vmatprep.subr.mxu0 %v312
    %388 = vmatpush1.msra.mxu0 %v311
    %389 = vmatprep.subr.mxu0 %v314
    %390 = vmatpush1.msra.mxu0 %v313
    %391 = vmatprep.subr.mxu0 %v316
    %392 = vmatpush1.msra.mxu0 %v315
    %393 = vmatprep.subr.mxu0 %v318
    %394 = vmatpush1.msra.mxu0 %v317
    %395 = vmatprep.subr.mxu0 %v320
    %396 = vmatpush1.msra.mxu0 %v319
    %397 = vmatprep.subr.mxu0 %v322
    %398 = vmatpush1.msra.mxu0 %v321
    %399 = vmatprep.subr.mxu0 %v324
    %400 = vmatpush1.msra.mxu0 %v323
    %401 = vmatprep.subr.mxu0 %v326
    %402 = vmatpush1.msra.mxu0 %v325
    %403 = vmatprep.subr.mxu0 %v328
    %404 = vmatpush1.msra.mxu0 %v327
    %405 = vmatprep.subr.mxu0 %v330
    %406 = vmatpush1.msra.mxu0 %v329
    %407 = vmatprep.subr.mxu0 %v332
    %408 = vmatpush1.msra.mxu0 %v331
    %409 = vmatprep.subr.mxu0 %v334
    %410 = vmatpush1.msra.mxu0 %v333
    %411 = vmatprep.subr.mxu0 %v336
    %412 = vmatpush1.msra.mxu0 %v335
    %413 = vmatprep.subr.mxu0 %v338
    %414 = vmatpush1.msra.mxu0 %v337
    %415 = vmatprep.subr.mxu0 %v340
    %416 = vmatpush1.msra.mxu0 %v339
    %417 = vmatprep.mubr.f32.mxu0 %v276
    %418 = vmatmul.mubr.f32.gmra.mrb[0].mxu0 %v275
    %v419 = vpop.f32.mrb[0].mxu0
    %v420 = vadd.f32 %v346, %v419
    %v421 = vpop.f32.mrb[0].mxu0
    %v422 = vadd.f32 %v350, %v421
    %423 = vdwg.mxu0
    %v424 = vmul.f32 %v420, 0.5
    %v425 = vmul.f32 %v422, 0.5
    %v426 = vtanh.pop %v424
    %v427 = vtanh.pop %v425
    %v428 = vadd.f32 %v426, 1.0
    %v429 = vadd.f32 %v427, 1.0
    %v430 = vmul.f32 %v428, 0.5
    %v431 = vmul.f32 %v429, 0.5
    %v432 = vld [vmem:[#allocation7] sm:$0xff]
    %v433 = vld [vmem:[#allocation7 + $0x8] sm:$0xff]
    %v434 = vld [vmem:[#allocation7 + $0x10] sm:$0xff]
    %v435 = vld [vmem:[#allocation7 + $0x18] sm:$0xff]
    %v436 = vld [vmem:[#allocation7 + $0x20] sm:$0xff]
    %v437 = vld [vmem:[#allocation7 + $0x28] sm:$0xff]
    %v438 = vld [vmem:[#allocation7 + $0x30] sm:$0xff]
    %v439 = vld [vmem:[#allocation7 + $0x38] sm:$0xff]
    %v440 = vld [vmem:[#allocation7 + $0x40] sm:$0xff]
    %v441 = vld [vmem:[#allocation7 + $0x48] sm:$0xff]
    %v442 = vld [vmem:[#allocation7 + $0x50] sm:$0xff]
    %v443 = vld [vmem:[#allocation7 + $0x58] sm:$0xff]
    %v444 = vld [vmem:[#allocation7 + $0x60] sm:$0xff]
    %v445 = vld [vmem:[#allocation7 + $0x68] sm:$0xff]
    %v446 = vld [vmem:[#allocation7 + $0x70] sm:$0xff]
    %v447 = vld [vmem:[#allocation7 + $0x78] sm:$0xff]
    %v448 = vld [vmem:[#allocation7 + $0x80] sm:$0xff]
    %v449 = vld [vmem:[#allocation7 + $0x88] sm:$0xff]
    %v450 = vld [vmem:[#allocation7 + $0x90] sm:$0xff]
    %v451 = vld [vmem:[#allocation7 + $0x98] sm:$0xff]
    %v452 = vld [vmem:[#allocation7 + $0xa0] sm:$0xff]
    %v453 = vld [vmem:[#allocation7 + $0xa8] sm:$0xff]
    %v454 = vld [vmem:[#allocation7 + $0xb0] sm:$0xff]
    %v455 = vld [vmem:[#allocation7 + $0xb8] sm:$0xff]
    %v456 = vld [vmem:[#allocation7 + $0xc0] sm:$0xff]
    %v457 = vld [vmem:[#allocation7 + $0xc8] sm:$0xff]
    %v458 = vld [vmem:[#allocation7 + $0xd0] sm:$0xff]
    %v459 = vld [vmem:[#allocation7 + $0xd8] sm:$0xff]
    %v460 = vld [vmem:[#allocation7 + $0xe0] sm:$0xff]
    %v461 = vld [vmem:[#allocation7 + $0xe8] sm:$0xff]
    %v462 = vld [vmem:[#allocation7 + $0xf0] sm:$0xff]
    %v463 = vld [vmem:[#allocation7 + $0xf8] sm:$0xff]
    %v464 = vld [vmem:[#allocation7 + $0x100] sm:$0xff]
    %v465 = vld [vmem:[#allocation7 + $0x108] sm:$0xff]
    %v466 = vld [vmem:[#allocation7 + $0x110] sm:$0xff]
    %v467 = vld [vmem:[#allocation7 + $0x118] sm:$0xff]
    %v468 = vld [vmem:[#allocation7 + $0x120] sm:$0xff]
    %v469 = vld [vmem:[#allocation7 + $0x128] sm:$0xff]
    %v470 = vld [vmem:[#allocation7 + $0x130] sm:$0xff]
    %v471 = vld [vmem:[#allocation7 + $0x138] sm:$0xff]
    %v472 = vld [vmem:[#allocation7 + $0x140] sm:$0xff]
    %v473 = vld [vmem:[#allocation7 + $0x148] sm:$0xff]
    %v474 = vld [vmem:[#allocation7 + $0x150] sm:$0xff]
    %v475 = vld [vmem:[#allocation7 + $0x158] sm:$0xff]
    %v476 = vld [vmem:[#allocation7 + $0x160] sm:$0xff]
    %v477 = vld [vmem:[#allocation7 + $0x168] sm:$0xff]
    %v478 = vld [vmem:[#allocation7 + $0x170] sm:$0xff]
    %v479 = vld [vmem:[#allocation7 + $0x178] sm:$0xff]
    %v480 = vld [vmem:[#allocation7 + $0x180] sm:$0xff]
    %v481 = vld [vmem:[#allocation7 + $0x188] sm:$0xff]
    %v482 = vld [vmem:[#allocation7 + $0x190] sm:$0xff]
    %v483 = vld [vmem:[#allocation7 + $0x198] sm:$0xff]
    %v484 = vld [vmem:[#allocation7 + $0x1a0] sm:$0xff]
    %v485 = vld [vmem:[#allocation7 + $0x1a8] sm:$0xff]
    %v486 = vld [vmem:[#allocation7 + $0x1b0] sm:$0xff]
    %v487 = vld [vmem:[#allocation7 + $0x1b8] sm:$0xff]
    %v488 = vld [vmem:[#allocation7 + $0x1c0] sm:$0xff]
    %v489 = vld [vmem:[#allocation7 + $0x1c8] sm:$0xff]
    %v490 = vld [vmem:[#allocation7 + $0x1d0] sm:$0xff]
    %v491 = vld [vmem:[#allocation7 + $0x1d8] sm:$0xff]
    %v492 = vld [vmem:[#allocation7 + $0x1e0] sm:$0xff]
    %v493 = vld [vmem:[#allocation7 + $0x1e8] sm:$0xff]
    %v494 = vld [vmem:[#allocation7 + $0x1f0] sm:$0xff]
    %v495 = vld [vmem:[#allocation7 + $0x1f8] sm:$0xff]
    %v496 = vld [vmem:[%s9] sm:$0x3]
    %v498 = vlaneseq
    %v499 = vshrl.u32 %v498, 7
    %v500 = vsub.s32 0, %v499
    %v501 = vrot.slane %v496, %v500
    %v502 = vlaneseq
    %v503 = vshrl.u32 %v502, 7
    %v504 = vsub.s32 1, %v503
    %v505 = vrot.slane %v496, %v504
    %508 = vmatprep.subr.mxu0 %v433
    %509 = vmatpush1.msra.mxu0 %v432
    %510 = vmatprep.subr.mxu0 %v435
    %511 = vmatpush1.msra.mxu0 %v434
    %512 = vmatprep.subr.mxu0 %v437
    %513 = vmatpush1.msra.mxu0 %v436
    %514 = vmatprep.subr.mxu0 %v439
    %515 = vmatpush1.msra.mxu0 %v438
    %516 = vmatprep.subr.mxu0 %v441
    %517 = vmatpush1.msra.mxu0 %v440
    %518 = vmatprep.subr.mxu0 %v443
    %519 = vmatpush1.msra.mxu0 %v442
    %520 = vmatprep.subr.mxu0 %v445
    %521 = vmatpush1.msra.mxu0 %v444
    %522 = vmatprep.subr.mxu0 %v447
    %523 = vmatpush1.msra.mxu0 %v446
    %524 = vmatprep.subr.mxu0 %v449
    %525 = vmatpush1.msra.mxu0 %v448
    %526 = vmatprep.subr.mxu0 %v451
    %527 = vmatpush1.msra.mxu0 %v450
    %528 = vmatprep.subr.mxu0 %v453
    %529 = vmatpush1.msra.mxu0 %v452
    %530 = vmatprep.subr.mxu0 %v455
    %531 = vmatpush1.msra.mxu0 %v454
    %532 = vmatprep.subr.mxu0 %v457
    %533 = vmatpush1.msra.mxu0 %v456
    %534 = vmatprep.subr.mxu0 %v459
    %535 = vmatpush1.msra.mxu0 %v458
    %536 = vmatprep.subr.mxu0 %v461
    %537 = vmatpush1.msra.mxu0 %v460
    %538 = vmatprep.subr.mxu0 %v463
    %539 = vmatpush1.msra.mxu0 %v462
    %540 = vmatprep.subr.mxu0 %v465
    %541 = vmatpush1.msra.mxu0 %v464
    %542 = vmatprep.subr.mxu0 %v467
    %543 = vmatpush1.msra.mxu0 %v466
    %544 = vmatprep.subr.mxu0 %v469
    %545 = vmatpush1.msra.mxu0 %v468
    %546 = vmatprep.subr.mxu0 %v471
    %547 = vmatpush1.msra.mxu0 %v470
    %548 = vmatprep.subr.mxu0 %v473
    %549 = vmatpush1.msra.mxu0 %v472
    %550 = vmatprep.subr.mxu0 %v475
    %551 = vmatpush1.msra.mxu0 %v474
    %552 = vmatprep.subr.mxu0 %v477
    %553 = vmatpush1.msra.mxu0 %v476
    %554 = vmatprep.subr.mxu0 %v479
    %555 = vmatpush1.msra.mxu0 %v478
    %556 = vmatprep.subr.mxu0 %v481
    %557 = vmatpush1.msra.mxu0 %v480
    %558 = vmatprep.subr.mxu0 %v483
    %559 = vmatpush1.msra.mxu0 %v482
    %560 = vmatprep.subr.mxu0 %v485
    %561 = vmatpush1.msra.mxu0 %v484
    %562 = vmatprep.subr.mxu0 %v487
    %563 = vmatpush1.msra.mxu0 %v486
    %564 = vmatprep.subr.mxu0 %v489
    %565 = vmatpush1.msra.mxu0 %v488
    %566 = vmatprep.subr.mxu0 %v491
    %567 = vmatpush1.msra.mxu0 %v490
    %568 = vmatprep.subr.mxu0 %v493
    %569 = vmatpush1.msra.mxu0 %v492
    %570 = vmatprep.subr.mxu0 %v495
    %571 = vmatpush1.msra.mxu0 %v494
    %572 = vmatprep.mubr.f32.mxu0 %v431
    %573 = vmatmul.mubr.f32.gmra.mrb[0].mxu0 %v430
    %v574 = vpop.f32.mrb[0].mxu0
    %v575 = vadd.f32 %v501, %v574
    %v576 = vpop.f32.mrb[0].mxu0
    %v577 = vadd.f32 %v505, %v576
    %578 = vdwg.mxu0
    %v579 = vmul.f32 %v575, 0.5
    %v580 = vmul.f32 %v577, 0.5
    %v581 = vtanh.pop %v579
    %v582 = vtanh.pop %v580
    %v583 = vadd.f32 %v581, 1.0
    %v584 = vadd.f32 %v582, 1.0
    %v585 = vmul.f32 %v583, 0.5
    %v586 = vmul.f32 %v584, 0.5
    %v587 = vld [vmem:[#allocation10] sm:$0xff]
    %v588 = vld [vmem:[#allocation10 + $0x8] sm:$0xff]
    %v589 = vld [vmem:[#allocation10 + $0x10] sm:$0xff]
    %v590 = vld [vmem:[#allocation10 + $0x18] sm:$0xff]
    %v591 = vld [vmem:[#allocation10 + $0x20] sm:$0xff]
    %v592 = vld [vmem:[#allocation10 + $0x28] sm:$0xff]
    %v593 = vld [vmem:[#allocation10 + $0x30] sm:$0xff]
    %v594 = vld [vmem:[#allocation10 + $0x38] sm:$0xff]
    %v595 = vld [vmem:[#allocation10 + $0x40] sm:$0xff]
    %v596 = vld [vmem:[#allocation10 + $0x48] sm:$0xff]
    %v597 = vld [vmem:[#allocation10 + $0x50] sm:$0xff]
    %v598 = vld [vmem:[#allocation10 + $0x58] sm:$0xff]
    %v599 = vld [vmem:[#allocation10 + $0x60] sm:$0xff]
    %v600 = vld [vmem:[#allocation10 + $0x68] sm:$0xff]
    %v601 = vld [vmem:[#allocation10 + $0x70] sm:$0xff]
    %v602 = vld [vmem:[#allocation10 + $0x78] sm:$0xff]
    %v603 = vld [vmem:[#allocation10 + $0x80] sm:$0xff]
    %v604 = vld [vmem:[#allocation10 + $0x88] sm:$0xff]
    %v605 = vld [vmem:[#allocation10 + $0x90] sm:$0xff]
    %v606 = vld [vmem:[#allocation10 + $0x98] sm:$0xff]
    %v607 = vld [vmem:[#allocation10 + $0xa0] sm:$0xff]
    %v608 = vld [vmem:[#allocation10 + $0xa8] sm:$0xff]
    %v609 = vld [vmem:[#allocation10 + $0xb0] sm:$0xff]
    %v610 = vld [vmem:[#allocation10 + $0xb8] sm:$0xff]
    %v611 = vld [vmem:[#allocation10 + $0xc0] sm:$0xff]
    %v612 = vld [vmem:[#allocation10 + $0xc8] sm:$0xff]
    %v613 = vld [vmem:[#allocation10 + $0xd0] sm:$0xff]
    %v614 = vld [vmem:[#allocation10 + $0xd8] sm:$0xff]
    %v615 = vld [vmem:[#allocation10 + $0xe0] sm:$0xff]
    %v616 = vld [vmem:[#allocation10 + $0xe8] sm:$0xff]
    %v617 = vld [vmem:[#allocation10 + $0xf0] sm:$0xff]
    %v618 = vld [vmem:[#allocation10 + $0xf8] sm:$0xff]
    %v619 = vld [vmem:[#allocation10 + $0x100] sm:$0xff]
    %v620 = vld [vmem:[#allocation10 + $0x108] sm:$0xff]
    %v621 = vld [vmem:[#allocation10 + $0x110] sm:$0xff]
    %v622 = vld [vmem:[#allocation10 + $0x118] sm:$0xff]
    %v623 = vld [vmem:[#allocation10 + $0x120] sm:$0xff]
    %v624 = vld [vmem:[#allocation10 + $0x128] sm:$0xff]
    %v625 = vld [vmem:[#allocation10 + $0x130] sm:$0xff]
    %v626 = vld [vmem:[#allocation10 + $0x138] sm:$0xff]
    %v627 = vld [vmem:[#allocation10 + $0x140] sm:$0xff]
    %v628 = vld [vmem:[#allocation10 + $0x148] sm:$0xff]
    %v629 = vld [vmem:[#allocation10 + $0x150] sm:$0xff]
    %v630 = vld [vmem:[#allocation10 + $0x158] sm:$0xff]
    %v631 = vld [vmem:[#allocation10 + $0x160] sm:$0xff]
    %v632 = vld [vmem:[#allocation10 + $0x168] sm:$0xff]
    %v633 = vld [vmem:[#allocation10 + $0x170] sm:$0xff]
    %v634 = vld [vmem:[#allocation10 + $0x178] sm:$0xff]
    %v635 = vld [vmem:[#allocation10 + $0x180] sm:$0xff]
    %v636 = vld [vmem:[#allocation10 + $0x188] sm:$0xff]
    %v637 = vld [vmem:[#allocation10 + $0x190] sm:$0xff]
    %v638 = vld [vmem:[#allocation10 + $0x198] sm:$0xff]
    %v639 = vld [vmem:[#allocation10 + $0x1a0] sm:$0xff]
    %v640 = vld [vmem:[#allocation10 + $0x1a8] sm:$0xff]
    %v641 = vld [vmem:[#allocation10 + $0x1b0] sm:$0xff]
    %v642 = vld [vmem:[#allocation10 + $0x1b8] sm:$0xff]
    %v643 = vld [vmem:[#allocation10 + $0x1c0] sm:$0xff]
    %v644 = vld [vmem:[#allocation10 + $0x1c8] sm:$0xff]
    %v645 = vld [vmem:[#allocation10 + $0x1d0] sm:$0xff]
    %v646 = vld [vmem:[#allocation10 + $0x1d8] sm:$0xff]
    %v647 = vld [vmem:[#allocation10 + $0x1e0] sm:$0xff]
    %v648 = vld [vmem:[#allocation10 + $0x1e8] sm:$0xff]
    %v649 = vld [vmem:[#allocation10 + $0x1f0] sm:$0xff]
    %v650 = vld [vmem:[#allocation10 + $0x1f8] sm:$0xff]
    %v651 = vld [vmem:[%s12] sm:$0x3]
    %v653 = vlaneseq
    %v654 = vshrl.u32 %v653, 7
    %v655 = vsub.s32 0, %v654
    %v656 = vrot.slane %v651, %v655
    %v657 = vlaneseq
    %v658 = vshrl.u32 %v657, 7
    %v659 = vsub.s32 1, %v658
    %v660 = vrot.slane %v651, %v659
    %663 = vmatprep.subr.mxu0 %v588
    %664 = vmatpush1.msra.mxu0 %v587
    %665 = vmatprep.subr.mxu0 %v590
    %666 = vmatpush1.msra.mxu0 %v589
    %667 = vmatprep.subr.mxu0 %v592
    %668 = vmatpush1.msra.mxu0 %v591
    %669 = vmatprep.subr.mxu0 %v594
    %670 = vmatpush1.msra.mxu0 %v593
    %671 = vmatprep.subr.mxu0 %v596
    %672 = vmatpush1.msra.mxu0 %v595
    %673 = vmatprep.subr.mxu0 %v598
    %674 = vmatpush1.msra.mxu0 %v597
    %675 = vmatprep.subr.mxu0 %v600
    %676 = vmatpush1.msra.mxu0 %v599
    %677 = vmatprep.subr.mxu0 %v602
    %678 = vmatpush1.msra.mxu0 %v601
    %679 = vmatprep.subr.mxu0 %v604
    %680 = vmatpush1.msra.mxu0 %v603
    %681 = vmatprep.subr.mxu0 %v606
    %682 = vmatpush1.msra.mxu0 %v605
    %683 = vmatprep.subr.mxu0 %v608
    %684 = vmatpush1.msra.mxu0 %v607
    %685 = vmatprep.subr.mxu0 %v610
    %686 = vmatpush1.msra.mxu0 %v609
    %687 = vmatprep.subr.mxu0 %v612
    %688 = vmatpush1.msra.mxu0 %v611
    %689 = vmatprep.subr.mxu0 %v614
    %690 = vmatpush1.msra.mxu0 %v613
    %691 = vmatprep.subr.mxu0 %v616
    %692 = vmatpush1.msra.mxu0 %v615
    %693 = vmatprep.subr.mxu0 %v618
    %694 = vmatpush1.msra.mxu0 %v617
    %695 = vmatprep.subr.mxu0 %v620
    %696 = vmatpush1.msra.mxu0 %v619
    %697 = vmatprep.subr.mxu0 %v622
    %698 = vmatpush1.msra.mxu0 %v621
    %699 = vmatprep.subr.mxu0 %v624
    %700 = vmatpush1.msra.mxu0 %v623
    %701 = vmatprep.subr.mxu0 %v626
    %702 = vmatpush1.msra.mxu0 %v625
    %703 = vmatprep.subr.mxu0 %v628
    %704 = vmatpush1.msra.mxu0 %v627
    %705 = vmatprep.subr.mxu0 %v630
    %706 = vmatpush1.msra.mxu0 %v629
    %707 = vmatprep.subr.mxu0 %v632
    %708 = vmatpush1.msra.mxu0 %v631
    %709 = vmatprep.subr.mxu0 %v634
    %710 = vmatpush1.msra.mxu0 %v633
    %711 = vmatprep.subr.mxu0 %v636
    %712 = vmatpush1.msra.mxu0 %v635
    %713 = vmatprep.subr.mxu0 %v638
    %714 = vmatpush1.msra.mxu0 %v637
    %715 = vmatprep.subr.mxu0 %v640
    %716 = vmatpush1.msra.mxu0 %v639
    %717 = vmatprep.subr.mxu0 %v642
    %718 = vmatpush1.msra.mxu0 %v641
    %719 = vmatprep.subr.mxu0 %v644
    %720 = vmatpush1.msra.mxu0 %v643
    %721 = vmatprep.subr.mxu0 %v646
    %722 = vmatpush1.msra.mxu0 %v645
    %723 = vmatprep.subr.mxu0 %v648
    %724 = vmatpush1.msra.mxu0 %v647
    %725 = vmatprep.subr.mxu0 %v650
    %726 = vmatpush1.msra.mxu0 %v649
    %727 = vmatprep.mubr.f32.mxu0 %v586
    %728 = vmatmul.mubr.f32.gmra.mrb[0].mxu0 %v585
    %v729 = vpop.f32.mrb[0].mxu0
    %v730 = vadd.f32 %v656, %v729
    %v731 = vpop.f32.mrb[0].mxu0
    %v732 = vadd.f32 %v660, %v731
    %733 = vdwg.mxu0
    %v734 = vmul.f32 %v730, 0.5
    %v735 = vmul.f32 %v732, 0.5
    %v736 = vtanh.pop %v734
    %v737 = vtanh.pop %v735
    %v738 = vadd.f32 %v736, 1.0
    %v739 = vadd.f32 %v737, 1.0
    %v740 = vmul.f32 %v738, 0.5
    %v741 = vmul.f32 %v739, 0.5
    %v742 = vld [vmem:[#allocation13] sm:$0xff]
    %v743 = vld [vmem:[#allocation13 + $0x8] sm:$0xff]
    %v744 = vld [vmem:[#allocation13 + $0x10] sm:$0xff]
    %v745 = vld [vmem:[#allocation13 + $0x18] sm:$0xff]
    %v746 = vld [vmem:[#allocation13 + $0x20] sm:$0xff]
    %v747 = vld [vmem:[#allocation13 + $0x28] sm:$0xff]
    %v748 = vld [vmem:[#allocation13 + $0x30] sm:$0xff]
    %v749 = vld [vmem:[#allocation13 + $0x38] sm:$0xff]
    %v750 = vld [vmem:[#allocation13 + $0x40] sm:$0xff]
    %v751 = vld [vmem:[#allocation13 + $0x48] sm:$0xff]
    %v752 = vld [vmem:[#allocation13 + $0x50] sm:$0xff]
    %v753 = vld [vmem:[#allocation13 + $0x58] sm:$0xff]
    %v754 = vld [vmem:[#allocation13 + $0x60] sm:$0xff]
    %v755 = vld [vmem:[#allocation13 + $0x68] sm:$0xff]
    %v756 = vld [vmem:[#allocation13 + $0x70] sm:$0xff]
    %v757 = vld [vmem:[#allocation13 + $0x78] sm:$0xff]
    %v758 = vld [vmem:[#allocation13 + $0x80] sm:$0xff]
    %v759 = vld [vmem:[#allocation13 + $0x88] sm:$0xff]
    %v760 = vld [vmem:[#allocation13 + $0x90] sm:$0xff]
    %v761 = vld [vmem:[#allocation13 + $0x98] sm:$0xff]
    %v762 = vld [vmem:[#allocation13 + $0xa0] sm:$0xff]
    %v763 = vld [vmem:[#allocation13 + $0xa8] sm:$0xff]
    %v764 = vld [vmem:[#allocation13 + $0xb0] sm:$0xff]
    %v765 = vld [vmem:[#allocation13 + $0xb8] sm:$0xff]
    %v766 = vld [vmem:[#allocation13 + $0xc0] sm:$0xff]
    %v767 = vld [vmem:[#allocation13 + $0xc8] sm:$0xff]
    %v768 = vld [vmem:[#allocation13 + $0xd0] sm:$0xff]
    %v769 = vld [vmem:[#allocation13 + $0xd8] sm:$0xff]
    %v770 = vld [vmem:[#allocation13 + $0xe0] sm:$0xff]
    %v771 = vld [vmem:[#allocation13 + $0xe8] sm:$0xff]
    %v772 = vld [vmem:[#allocation13 + $0xf0] sm:$0xff]
    %v773 = vld [vmem:[#allocation13 + $0xf8] sm:$0xff]
    %v774 = vld [vmem:[#allocation13 + $0x100] sm:$0xff]
    %v775 = vld [vmem:[#allocation13 + $0x108] sm:$0xff]
    %v776 = vld [vmem:[#allocation13 + $0x110] sm:$0xff]
    %v777 = vld [vmem:[#allocation13 + $0x118] sm:$0xff]
    %v778 = vld [vmem:[#allocation13 + $0x120] sm:$0xff]
    %v779 = vld [vmem:[#allocation13 + $0x128] sm:$0xff]
    %v780 = vld [vmem:[#allocation13 + $0x130] sm:$0xff]
    %v781 = vld [vmem:[#allocation13 + $0x138] sm:$0xff]
    %v782 = vld [vmem:[#allocation13 + $0x140] sm:$0xff]
    %v783 = vld [vmem:[#allocation13 + $0x148] sm:$0xff]
    %v784 = vld [vmem:[#allocation13 + $0x150] sm:$0xff]
    %v785 = vld [vmem:[#allocation13 + $0x158] sm:$0xff]
    %v786 = vld [vmem:[#allocation13 + $0x160] sm:$0xff]
    %v787 = vld [vmem:[#allocation13 + $0x168] sm:$0xff]
    %v788 = vld [vmem:[#allocation13 + $0x170] sm:$0xff]
    %v789 = vld [vmem:[#allocation13 + $0x178] sm:$0xff]
    %v790 = vld [vmem:[#allocation13 + $0x180] sm:$0xff]
    %v791 = vld [vmem:[#allocation13 + $0x188] sm:$0xff]
    %v792 = vld [vmem:[#allocation13 + $0x190] sm:$0xff]
    %v793 = vld [vmem:[#allocation13 + $0x198] sm:$0xff]
    %v794 = vld [vmem:[#allocation13 + $0x1a0] sm:$0xff]
    %v795 = vld [vmem:[#allocation13 + $0x1a8] sm:$0xff]
    %v796 = vld [vmem:[#allocation13 + $0x1b0] sm:$0xff]
    %v797 = vld [vmem:[#allocation13 + $0x1b8] sm:$0xff]
    %v798 = vld [vmem:[#allocation13 + $0x1c0] sm:$0xff]
    %v799 = vld [vmem:[#allocation13 + $0x1c8] sm:$0xff]
    %v800 = vld [vmem:[#allocation13 + $0x1d0] sm:$0xff]
    %v801 = vld [vmem:[#allocation13 + $0x1d8] sm:$0xff]
    %v802 = vld [vmem:[#allocation13 + $0x1e0] sm:$0xff]
    %v803 = vld [vmem:[#allocation13 + $0x1e8] sm:$0xff]
    %v804 = vld [vmem:[#allocation13 + $0x1f0] sm:$0xff]
    %v805 = vld [vmem:[#allocation13 + $0x1f8] sm:$0xff]
    %v806 = vld [vmem:[%s15] sm:$0x3]
    %v808 = vlaneseq
    %v809 = vshrl.u32 %v808, 7
    %v810 = vsub.s32 0, %v809
    %v811 = vrot.slane %v806, %v810
    %v812 = vlaneseq
    %v813 = vshrl.u32 %v812, 7
    %v814 = vsub.s32 1, %v813
    %v815 = vrot.slane %v806, %v814
    %818 = vmatprep.subr.mxu0 %v743
    %819 = vmatpush1.msra.mxu0 %v742
    %820 = vmatprep.subr.mxu0 %v745
    %821 = vmatpush1.msra.mxu0 %v744
    %822 = vmatprep.subr.mxu0 %v747
    %823 = vmatpush1.msra.mxu0 %v746
    %824 = vmatprep.subr.mxu0 %v749
    %825 = vmatpush1.msra.mxu0 %v748
    %826 = vmatprep.subr.mxu0 %v751
    %827 = vmatpush1.msra.mxu0 %v750
    %828 = vmatprep.subr.mxu0 %v753
    %829 = vmatpush1.msra.mxu0 %v752
    %830 = vmatprep.subr.mxu0 %v755
    %831 = vmatpush1.msra.mxu0 %v754
    %832 = vmatprep.subr.mxu0 %v757
    %833 = vmatpush1.msra.mxu0 %v756
    %834 = vmatprep.subr.mxu0 %v759
    %835 = vmatpush1.msra.mxu0 %v758
    %836 = vmatprep.subr.mxu0 %v761
    %837 = vmatpush1.msra.mxu0 %v760
    %838 = vmatprep.subr.mxu0 %v763
    %839 = vmatpush1.msra.mxu0 %v762
    %840 = vmatprep.subr.mxu0 %v765
    %841 = vmatpush1.msra.mxu0 %v764
    %842 = vmatprep.subr.mxu0 %v767
    %843 = vmatpush1.msra.mxu0 %v766
    %844 = vmatprep.subr.mxu0 %v769
    %845 = vmatpush1.msra.mxu0 %v768
    %846 = vmatprep.subr.mxu0 %v771
    %847 = vmatpush1.msra.mxu0 %v770
    %848 = vmatprep.subr.mxu0 %v773
    %849 = vmatpush1.msra.mxu0 %v772
    %850 = vmatprep.subr.mxu0 %v775
    %851 = vmatpush1.msra.mxu0 %v774
    %852 = vmatprep.subr.mxu0 %v777
    %853 = vmatpush1.msra.mxu0 %v776
    %854 = vmatprep.subr.mxu0 %v779
    %855 = vmatpush1.msra.mxu0 %v778
    %856 = vmatprep.subr.mxu0 %v781
    %857 = vmatpush1.msra.mxu0 %v780
    %858 = vmatprep.subr.mxu0 %v783
    %859 = vmatpush1.msra.mxu0 %v782
    %860 = vmatprep.subr.mxu0 %v785
    %861 = vmatpush1.msra.mxu0 %v784
    %862 = vmatprep.subr.mxu0 %v787
    %863 = vmatpush1.msra.mxu0 %v786
    %864 = vmatprep.subr.mxu0 %v789
    %865 = vmatpush1.msra.mxu0 %v788
    %866 = vmatprep.subr.mxu0 %v791
    %867 = vmatpush1.msra.mxu0 %v790
    %868 = vmatprep.subr.mxu0 %v793
    %869 = vmatpush1.msra.mxu0 %v792
    %870 = vmatprep.subr.mxu0 %v795
    %871 = vmatpush1.msra.mxu0 %v794
    %872 = vmatprep.subr.mxu0 %v797
    %873 = vmatpush1.msra.mxu0 %v796
    %874 = vmatprep.subr.mxu0 %v799
    %875 = vmatpush1.msra.mxu0 %v798
    %876 = vmatprep.subr.mxu0 %v801
    %877 = vmatpush1.msra.mxu0 %v800
    %878 = vmatprep.subr.mxu0 %v803
    %879 = vmatpush1.msra.mxu0 %v802
    %880 = vmatprep.subr.mxu0 %v805
    %881 = vmatpush1.msra.mxu0 %v804
    %882 = vmatprep.mubr.f32.mxu0 %v741
    %883 = vmatmul.mubr.f32.gmra.mrb[0].mxu0 %v740
    %v884 = vpop.f32.mrb[0].mxu0
    %v885 = vadd.f32 %v811, %v884
    %v886 = vpop.f32.mrb[0].mxu0
    %v887 = vadd.f32 %v815, %v886
    %888 = vdwg.mxu0
    %v889 = vmul.f32 %v885, 0.5
    %v890 = vmul.f32 %v887, 0.5
    %v891 = vtanh.pop %v889
    %v892 = vtanh.pop %v890
    %v893 = vadd.f32 %v891, 1.0
    %v894 = vadd.f32 %v892, 1.0
    %v895 = vmul.f32 %v893, 0.5
    %v896 = vmul.f32 %v894, 0.5
    %v897 = vld [vmem:[%s16] sm:$0x3]
    %v899 = vlaneseq
    %v900 = vshrl.u32 %v899, 7
    %v901 = vsub.s32 0, %v900
    %v902 = vrot.slane %v897, %v901
    %v903 = vlaneseq
    %v904 = vshrl.u32 %v903, 7
    %v905 = vsub.s32 1, %v904
    %v906 = vrot.slane %v897, %v905
    %v909 = vmul.f32 %v895, %v902
    %v910 = vmul.f32 %v896, %v906
    %v911 = vadd.f32 %v909, %v910
    %912 = vadd.xlane.f32.xlu0 %v911
    %v913 = vpop.xlane.xlu0 %912
    %v914 = vld [vmem:[#allocation2] sm:$0x1]
    %v916 = vlaneseq
    %v917 = vshrl.u32 %v916, 7
    %v918 = vsub.s32 0, %v917
    %v919 = vrot.slane %v914, %v918
    %v921 = vadd.f32 %v913, %v919
    %vm922 = vcmask 7168
    %923 = vst.msk [vmem:[%s18] sm:$0xff] %vm922, %v921
    %v924 = vsub.f32 1.0, %v895
    %v925 = vsub.f32 1.0, %v896
    %v926 = vmul.f32 %v909, %v924
    %v927 = vmul.f32 %v910, %v925
    %v928 = vld [vmem:[#allocation14] sm:$0xff]
    %v929 = vld [vmem:[#allocation14 + $0x8] sm:$0xff]
    %v930 = vld [vmem:[#allocation14 + $0x10] sm:$0xff]
    %v931 = vld [vmem:[#allocation14 + $0x18] sm:$0xff]
    %v932 = vld [vmem:[#allocation14 + $0x20] sm:$0xff]
    %v933 = vld [vmem:[#allocation14 + $0x28] sm:$0xff]
    %v934 = vld [vmem:[#allocation14 + $0x30] sm:$0xff]
    %v935 = vld [vmem:[#allocation14 + $0x38] sm:$0xff]
    %v936 = vld [vmem:[#allocation14 + $0x40] sm:$0xff]
    %v937 = vld [vmem:[#allocation14 + $0x48] sm:$0xff]
    %v938 = vld [vmem:[#allocation14 + $0x50] sm:$0xff]
    %v939 = vld [vmem:[#allocation14 + $0x58] sm:$0xff]
    %v940 = vld [vmem:[#allocation14 + $0x60] sm:$0xff]
    %v941 = vld [vmem:[#allocation14 + $0x68] sm:$0xff]
    %v942 = vld [vmem:[#allocation14 + $0x70] sm:$0xff]
    %v943 = vld [vmem:[#allocation14 + $0x78] sm:$0xff]
    %v944 = vld [vmem:[#allocation14 + $0x80] sm:$0xff]
    %v945 = vld [vmem:[#allocation14 + $0x88] sm:$0xff]
    %v946 = vld [vmem:[#allocation14 + $0x90] sm:$0xff]
    %v947 = vld [vmem:[#allocation14 + $0x98] sm:$0xff]
    %v948 = vld [vmem:[#allocation14 + $0xa0] sm:$0xff]
    %v949 = vld [vmem:[#allocation14 + $0xa8] sm:$0xff]
    %v950 = vld [vmem:[#allocation14 + $0xb0] sm:$0xff]
    %v951 = vld [vmem:[#allocation14 + $0xb8] sm:$0xff]
    %v952 = vld [vmem:[#allocation14 + $0xc0] sm:$0xff]
    %v953 = vld [vmem:[#allocation14 + $0xc8] sm:$0xff]
    %v954 = vld [vmem:[#allocation14 + $0xd0] sm:$0xff]
    %v955 = vld [vmem:[#allocation14 + $0xd8] sm:$0xff]
    %v956 = vld [vmem:[#allocation14 + $0xe0] sm:$0xff]
    %v957 = vld [vmem:[#allocation14 + $0xe8] sm:$0xff]
    %v958 = vld [vmem:[#allocation14 + $0xf0] sm:$0xff]
    %v959 = vld [vmem:[#allocation14 + $0xf8] sm:$0xff]
    %v960 = vld [vmem:[#allocation14 + $0x100] sm:$0xff]
    %v961 = vld [vmem:[#allocation14 + $0x108] sm:$0xff]
    %v962 = vld [vmem:[#allocation14 + $0x110] sm:$0xff]
    %v963 = vld [vmem:[#allocation14 + $0x118] sm:$0xff]
    %v964 = vld [vmem:[#allocation14 + $0x120] sm:$0xff]
    %v965 = vld [vmem:[#allocation14 + $0x128] sm:$0xff]
    %v966 = vld [vmem:[#allocation14 + $0x130] sm:$0xff]
    %v967 = vld [vmem:[#allocation14 + $0x138] sm:$0xff]
    %v968 = vld [vmem:[#allocation14 + $0x140] sm:$0xff]
    %v969 = vld [vmem:[#allocation14 + $0x148] sm:$0xff]
    %v970 = vld [vmem:[#allocation14 + $0x150] sm:$0xff]
    %v971 = vld [vmem:[#allocation14 + $0x158] sm:$0xff]
    %v972 = vld [vmem:[#allocation14 + $0x160] sm:$0xff]
    %v973 = vld [vmem:[#allocation14 + $0x168] sm:$0xff]
    %v974 = vld [vmem:[#allocation14 + $0x170] sm:$0xff]
    %v975 = vld [vmem:[#allocation14 + $0x178] sm:$0xff]
    %v976 = vld [vmem:[#allocation14 + $0x180] sm:$0xff]
    %v977 = vld [vmem:[#allocation14 + $0x188] sm:$0xff]
    %v978 = vld [vmem:[#allocation14 + $0x190] sm:$0xff]
    %v979 = vld [vmem:[#allocation14 + $0x198] sm:$0xff]
    %v980 = vld [vmem:[#allocation14 + $0x1a0] sm:$0xff]
    %v981 = vld [vmem:[#allocation14 + $0x1a8] sm:$0xff]
    %v982 = vld [vmem:[#allocation14 + $0x1b0] sm:$0xff]
    %v983 = vld [vmem:[#allocation14 + $0x1b8] sm:$0xff]
    %v984 = vld [vmem:[#allocation14 + $0x1c0] sm:$0xff]
    %v985 = vld [vmem:[#allocation14 + $0x1c8] sm:$0xff]
    %v986 = vld [vmem:[#allocation14 + $0x1d0] sm:$0xff]
    %v987 = vld [vmem:[#allocation14 + $0x1d8] sm:$0xff]
    %v988 = vld [vmem:[#allocation14 + $0x1e0] sm:$0xff]
    %v989 = vld [vmem:[#allocation14 + $0x1e8] sm:$0xff]
    %v990 = vld [vmem:[#allocation14 + $0x1f0] sm:$0xff]
    %v991 = vld [vmem:[#allocation14 + $0x1f8] sm:$0xff]
    %992 = vmatprep.subr.mxu0 %v929
    %993 = vmatpush1.msra.mxu0 %v928
    %994 = vmatprep.subr.mxu0 %v931
    %995 = vmatpush1.msra.mxu0 %v930
    %996 = vmatprep.subr.mxu0 %v933
    %997 = vmatpush1.msra.mxu0 %v932
    %998 = vmatprep.subr.mxu0 %v935
    %999 = vmatpush1.msra.mxu0 %v934
    %1000 = vmatprep.subr.mxu0 %v937
    %1001 = vmatpush1.msra.mxu0 %v936
    %1002 = vmatprep.subr.mxu0 %v939
    %1003 = vmatpush1.msra.mxu0 %v938
    %1004 = vmatprep.subr.mxu0 %v941
    %1005 = vmatpush1.msra.mxu0 %v940
    %1006 = vmatprep.subr.mxu0 %v943
    %1007 = vmatpush1.msra.mxu0 %v942
    %1008 = vmatprep.subr.mxu0 %v945
    %1009 = vmatpush1.msra.mxu0 %v944
    %1010 = vmatprep.subr.mxu0 %v947
    %1011 = vmatpush1.msra.mxu0 %v946
    %1012 = vmatprep.subr.mxu0 %v949
    %1013 = vmatpush1.msra.mxu0 %v948
    %1014 = vmatprep.subr.mxu0 %v951
    %1015 = vmatpush1.msra.mxu0 %v950
    %1016 = vmatprep.subr.mxu0 %v953
    %1017 = vmatpush1.msra.mxu0 %v952
    %1018 = vmatprep.subr.mxu0 %v955
    %1019 = vmatpush1.msra.mxu0 %v954
    %1020 = vmatprep.subr.mxu0 %v957
    %1021 = vmatpush1.msra.mxu0 %v956
    %1022 = vmatprep.subr.mxu0 %v959
    %1023 = vmatpush1.msra.mxu0 %v958
    %1024 = vmatprep.subr.mxu0 %v961
    %1025 = vmatpush1.msra.mxu0 %v960
    %1026 = vmatprep.subr.mxu0 %v963
    %1027 = vmatpush1.msra.mxu0 %v962
    %1028 = vmatprep.subr.mxu0 %v965
    %1029 = vmatpush1.msra.mxu0 %v964
    %1030 = vmatprep.subr.mxu0 %v967
    %1031 = vmatpush1.msra.mxu0 %v966
    %1032 = vmatprep.subr.mxu0 %v969
    %1033 = vmatpush1.msra.mxu0 %v968
    %1034 = vmatprep.subr.mxu0 %v971
    %1035 = vmatpush1.msra.mxu0 %v970
    %1036 = vmatprep.subr.mxu0 %v973
    %1037 = vmatpush1.msra.mxu0 %v972
    %1038 = vmatprep.subr.mxu0 %v975
    %1039 = vmatpush1.msra.mxu0 %v974
    %1040 = vmatprep.subr.mxu0 %v977
    %1041 = vmatpush1.msra.mxu0 %v976
    %1042 = vmatprep.subr.mxu0 %v979
    %1043 = vmatpush1.msra.mxu0 %v978
    %1044 = vmatprep.subr.mxu0 %v981
    %1045 = vmatpush1.msra.mxu0 %v980
    %1046 = vmatprep.subr.mxu0 %v983
    %1047 = vmatpush1.msra.mxu0 %v982
    %1048 = vmatprep.subr.mxu0 %v985
    %1049 = vmatpush1.msra.mxu0 %v984
    %1050 = vmatprep.subr.mxu0 %v987
    %1051 = vmatpush1.msra.mxu0 %v986
    %1052 = vmatprep.subr.mxu0 %v989
    %1053 = vmatpush1.msra.mxu0 %v988
    %1054 = vmatprep.subr.mxu0 %v991
    %1055 = vmatpush1.msra.mxu0 %v990
    %1056 = vmatprep.mubr.f32.mxu0 %v927
    %1057 = vmatmul.mubr.f32.gmra.mrb[0].mxu0 %v926
    %v1058 = vpop.f32.mrb[0].mxu0
    %v1059 = vadd.f32 0.0, %v1058
    %v1060 = vpop.f32.mrb[0].mxu0
    %v1061 = vadd.f32 0.0, %v1060
    %1062 = vdwg.mxu0
    %v1063 = vmul.f32 %v1059, %v740
    %v1064 = vmul.f32 %v1061, %v741
    %v1065 = vsub.f32 1.0, %v740
    %v1066 = vsub.f32 1.0, %v741
    %v1067 = vmul.f32 %v1063, %v1065
    %v1068 = vmul.f32 %v1064, %v1066
    %v1069 = vld [vmem:[#allocation11] sm:$0xff]
    %v1070 = vld [vmem:[#allocation11 + $0x8] sm:$0xff]
    %v1071 = vld [vmem:[#allocation11 + $0x10] sm:$0xff]
    %v1072 = vld [vmem:[#allocation11 + $0x18] sm:$0xff]
    %v1073 = vld [vmem:[#allocation11 + $0x20] sm:$0xff]
    %v1074 = vld [vmem:[#allocation11 + $0x28] sm:$0xff]
    %v1075 = vld [vmem:[#allocation11 + $0x30] sm:$0xff]
    %v1076 = vld [vmem:[#allocation11 + $0x38] sm:$0xff]
    %v1077 = vld [vmem:[#allocation11 + $0x40] sm:$0xff]
    %v1078 = vld [vmem:[#allocation11 + $0x48] sm:$0xff]
    %v1079 = vld [vmem:[#allocation11 + $0x50] sm:$0xff]
    %v1080 = vld [vmem:[#allocation11 + $0x58] sm:$0xff]
    %v1081 = vld [vmem:[#allocation11 + $0x60] sm:$0xff]
    %v1082 = vld [vmem:[#allocation11 + $0x68] sm:$0xff]
    %v1083 = vld [vmem:[#allocation11 + $0x70] sm:$0xff]
    %v1084 = vld [vmem:[#allocation11 + $0x78] sm:$0xff]
    %v1085 = vld [vmem:[#allocation11 + $0x80] sm:$0xff]
    %v1086 = vld [vmem:[#allocation11 + $0x88] sm:$0xff]
    %v1087 = vld [vmem:[#allocation11 + $0x90] sm:$0xff]
    %v1088 = vld [vmem:[#allocation11 + $0x98] sm:$0xff]
    %v1089 = vld [vmem:[#allocation11 + $0xa0] sm:$0xff]
    %v1090 = vld [vmem:[#allocation11 + $0xa8] sm:$0xff]
    %v1091 = vld [vmem:[#allocation11 + $0xb0] sm:$0xff]
    %v1092 = vld [vmem:[#allocation11 + $0xb8] sm:$0xff]
    %v1093 = vld [vmem:[#allocation11 + $0xc0] sm:$0xff]
    %v1094 = vld [vmem:[#allocation11 + $0xc8] sm:$0xff]
    %v1095 = vld [vmem:[#allocation11 + $0xd0] sm:$0xff]
    %v1096 = vld [vmem:[#allocation11 + $0xd8] sm:$0xff]
    %v1097 = vld [vmem:[#allocation11 + $0xe0] sm:$0xff]
    %v1098 = vld [vmem:[#allocation11 + $0xe8] sm:$0xff]
    %v1099 = vld [vmem:[#allocation11 + $0xf0] sm:$0xff]
    %v1100 = vld [vmem:[#allocation11 + $0xf8] sm:$0xff]
    %v1101 = vld [vmem:[#allocation11 + $0x100] sm:$0xff]
    %v1102 = vld [vmem:[#allocation11 + $0x108] sm:$0xff]
    %v1103 = vld [vmem:[#allocation11 + $0x110] sm:$0xff]
    %v1104 = vld [vmem:[#allocation11 + $0x118] sm:$0xff]
    %v1105 = vld [vmem:[#allocation11 + $0x120] sm:$0xff]
    %v1106 = vld [vmem:[#allocation11 + $0x128] sm:$0xff]
    %v1107 = vld [vmem:[#allocation11 + $0x130] sm:$0xff]
    %v1108 = vld [vmem:[#allocation11 + $0x138] sm:$0xff]
    %v1109 = vld [vmem:[#allocation11 + $0x140] sm:$0xff]
    %v1110 = vld [vmem:[#allocation11 + $0x148] sm:$0xff]
    %v1111 = vld [vmem:[#allocation11 + $0x150] sm:$0xff]
    %v1112 = vld [vmem:[#allocation11 + $0x158] sm:$0xff]
    %v1113 = vld [vmem:[#allocation11 + $0x160] sm:$0xff]
    %v1114 = vld [vmem:[#allocation11 + $0x168] sm:$0xff]
    %v1115 = vld [vmem:[#allocation11 + $0x170] sm:$0xff]
    %v1116 = vld [vmem:[#allocation11 + $0x178] sm:$0xff]
    %v1117 = vld [vmem:[#allocation11 + $0x180] sm:$0xff]
    %v1118 = vld [vmem:[#allocation11 + $0x188] sm:$0xff]
    %v1119 = vld [vmem:[#allocation11 + $0x190] sm:$0xff]
    %v1120 = vld [vmem:[#allocation11 + $0x198] sm:$0xff]
    %v1121 = vld [vmem:[#allocation11 + $0x1a0] sm:$0xff]
    %v1122 = vld [vmem:[#allocation11 + $0x1a8] sm:$0xff]
    %v1123 = vld [vmem:[#allocation11 + $0x1b0] sm:$0xff]
    %v1124 = vld [vmem:[#allocation11 + $0x1b8] sm:$0xff]
    %v1125 = vld [vmem:[#allocation11 + $0x1c0] sm:$0xff]
    %v1126 = vld [vmem:[#allocation11 + $0x1c8] sm:$0xff]
    %v1127 = vld [vmem:[#allocation11 + $0x1d0] sm:$0xff]
    %v1128 = vld [vmem:[#allocation11 + $0x1d8] sm:$0xff]
    %v1129 = vld [vmem:[#allocation11 + $0x1e0] sm:$0xff]
    %v1130 = vld [vmem:[#allocation11 + $0x1e8] sm:$0xff]
    %v1131 = vld [vmem:[#allocation11 + $0x1f0] sm:$0xff]
    %v1132 = vld [vmem:[#allocation11 + $0x1f8] sm:$0xff]
    %1133 = vmatprep.subr.mxu0 %v1070
    %1134 = vmatpush1.msra.mxu0 %v1069
    %1135 = vmatprep.subr.mxu0 %v1072
    %1136 = vmatpush1.msra.mxu0 %v1071
    %1137 = vmatprep.subr.mxu0 %v1074
    %1138 = vmatpush1.msra.mxu0 %v1073
    %1139 = vmatprep.subr.mxu0 %v1076
    %1140 = vmatpush1.msra.mxu0 %v1075
    %1141 = vmatprep.subr.mxu0 %v1078
    %1142 = vmatpush1.msra.mxu0 %v1077
    %1143 = vmatprep.subr.mxu0 %v1080
    %1144 = vmatpush1.msra.mxu0 %v1079
    %1145 = vmatprep.subr.mxu0 %v1082
    %1146 = vmatpush1.msra.mxu0 %v1081
    %1147 = vmatprep.subr.mxu0 %v1084
    %1148 = vmatpush1.msra.mxu0 %v1083
    %1149 = vmatprep.subr.mxu0 %v1086
    %1150 = vmatpush1.msra.mxu0 %v1085
    %1151 = vmatprep.subr.mxu0 %v1088
    %1152 = vmatpush1.msra.mxu0 %v1087
    %1153 = vmatprep.subr.mxu0 %v1090
    %1154 = vmatpush1.msra.mxu0 %v1089
    %1155 = vmatprep.subr.mxu0 %v1092
    %1156 = vmatpush1.msra.mxu0 %v1091
    %1157 = vmatprep.subr.mxu0 %v1094
    %1158 = vmatpush1.msra.mxu0 %v1093
    %1159 = vmatprep.subr.mxu0 %v1096
    %1160 = vmatpush1.msra.mxu0 %v1095
    %1161 = vmatprep.subr.mxu0 %v1098
    %1162 = vmatpush1.msra.mxu0 %v1097
    %1163 = vmatprep.subr.mxu0 %v1100
    %1164 = vmatpush1.msra.mxu0 %v1099
    %1165 = vmatprep.subr.mxu0 %v1102
    %1166 = vmatpush1.msra.mxu0 %v1101
    %1167 = vmatprep.subr.mxu0 %v1104
    %1168 = vmatpush1.msra.mxu0 %v1103
    %1169 = vmatprep.subr.mxu0 %v1106
    %1170 = vmatpush1.msra.mxu0 %v1105
    %1171 = vmatprep.subr.mxu0 %v1108
    %1172 = vmatpush1.msra.mxu0 %v1107
    %1173 = vmatprep.subr.mxu0 %v1110
    %1174 = vmatpush1.msra.mxu0 %v1109
    %1175 = vmatprep.subr.mxu0 %v1112
    %1176 = vmatpush1.msra.mxu0 %v1111
    %1177 = vmatprep.subr.mxu0 %v1114
    %1178 = vmatpush1.msra.mxu0 %v1113
    %1179 = vmatprep.subr.mxu0 %v1116
    %1180 = vmatpush1.msra.mxu0 %v1115
    %1181 = vmatprep.subr.mxu0 %v1118
    %1182 = vmatpush1.msra.mxu0 %v1117
    %1183 = vmatprep.subr.mxu0 %v1120
    %1184 = vmatpush1.msra.mxu0 %v1119
    %1185 = vmatprep.subr.mxu0 %v1122
    %1186 = vmatpush1.msra.mxu0 %v1121
    %1187 = vmatprep.subr.mxu0 %v1124
    %1188 = vmatpush1.msra.mxu0 %v1123
    %1189 = vmatprep.subr.mxu0 %v1126
    %1190 = vmatpush1.msra.mxu0 %v1125
    %1191 = vmatprep.subr.mxu0 %v1128
    %1192 = vmatpush1.msra.mxu0 %v1127
    %1193 = vmatprep.subr.mxu0 %v1130
    %1194 = vmatpush1.msra.mxu0 %v1129
    %1195 = vmatprep.subr.mxu0 %v1132
    %1196 = vmatpush1.msra.mxu0 %v1131
    %1197 = vmatprep.mubr.f32.mxu0 %v1068
    %1198 = vmatmul.mubr.f32.gmra.mrb[0].mxu0 %v1067
    %v1199 = vpop.f32.mrb[0].mxu0
    %v1200 = vadd.f32 0.0, %v1199
    %v1201 = vpop.f32.mrb[0].mxu0
    %v1202 = vadd.f32 0.0, %v1201
    %1203 = vdwg.mxu0
    %v1204 = vmul.f32 %v1200, %v585
    %v1205 = vmul.f32 %v1202, %v586
    %v1206 = vsub.f32 1.0, %v585
    %v1207 = vsub.f32 1.0, %v586
    %v1208 = vmul.f32 %v1204, %v1206
    %v1209 = vmul.f32 %v1205, %v1207
    %v1210 = vld [vmem:[#allocation8] sm:$0xff]
    %v1211 = vld [vmem:[#allocation8 + $0x8] sm:$0xff]
    %v1212 = vld [vmem:[#allocation8 + $0x10] sm:$0xff]
    %v1213 = vld [vmem:[#allocation8 + $0x18] sm:$0xff]
    %v1214 = vld [vmem:[#allocation8 + $0x20] sm:$0xff]
    %v1215 = vld [vmem:[#allocation8 + $0x28] sm:$0xff]
    %v1216 = vld [vmem:[#allocation8 + $0x30] sm:$0xff]
    %v1217 = vld [vmem:[#allocation8 + $0x38] sm:$0xff]
    %v1218 = vld [vmem:[#allocation8 + $0x40] sm:$0xff]
    %v1219 = vld [vmem:[#allocation8 + $0x48] sm:$0xff]
    %v1220 = vld [vmem:[#allocation8 + $0x50] sm:$0xff]
    %v1221 = vld [vmem:[#allocation8 + $0x58] sm:$0xff]
    %v1222 = vld [vmem:[#allocation8 + $0x60] sm:$0xff]
    %v1223 = vld [vmem:[#allocation8 + $0x68] sm:$0xff]
    %v1224 = vld [vmem:[#allocation8 + $0x70] sm:$0xff]
    %v1225 = vld [vmem:[#allocation8 + $0x78] sm:$0xff]
    %v1226 = vld [vmem:[#allocation8 + $0x80] sm:$0xff]
    %v1227 = vld [vmem:[#allocation8 + $0x88] sm:$0xff]
    %v1228 = vld [vmem:[#allocation8 + $0x90] sm:$0xff]
    %v1229 = vld [vmem:[#allocation8 + $0x98] sm:$0xff]
    %v1230 = vld [vmem:[#allocation8 + $0xa0] sm:$0xff]
    %v1231 = vld [vmem:[#allocation8 + $0xa8] sm:$0xff]
    %v1232 = vld [vmem:[#allocation8 + $0xb0] sm:$0xff]
    %v1233 = vld [vmem:[#allocation8 + $0xb8] sm:$0xff]
    %v1234 = vld [vmem:[#allocation8 + $0xc0] sm:$0xff]
    %v1235 = vld [vmem:[#allocation8 + $0xc8] sm:$0xff]
    %v1236 = vld [vmem:[#allocation8 + $0xd0] sm:$0xff]
    %v1237 = vld [vmem:[#allocation8 + $0xd8] sm:$0xff]
    %v1238 = vld [vmem:[#allocation8 + $0xe0] sm:$0xff]
    %v1239 = vld [vmem:[#allocation8 + $0xe8] sm:$0xff]
    %v1240 = vld [vmem:[#allocation8 + $0xf0] sm:$0xff]
    %v1241 = vld [vmem:[#allocation8 + $0xf8] sm:$0xff]
    %v1242 = vld [vmem:[#allocation8 + $0x100] sm:$0xff]
    %v1243 = vld [vmem:[#allocation8 + $0x108] sm:$0xff]
    %v1244 = vld [vmem:[#allocation8 + $0x110] sm:$0xff]
    %v1245 = vld [vmem:[#allocation8 + $0x118] sm:$0xff]
    %v1246 = vld [vmem:[#allocation8 + $0x120] sm:$0xff]
    %v1247 = vld [vmem:[#allocation8 + $0x128] sm:$0xff]
    %v1248 = vld [vmem:[#allocation8 + $0x130] sm:$0xff]
    %v1249 = vld [vmem:[#allocation8 + $0x138] sm:$0xff]
    %v1250 = vld [vmem:[#allocation8 + $0x140] sm:$0xff]
    %v1251 = vld [vmem:[#allocation8 + $0x148] sm:$0xff]
    %v1252 = vld [vmem:[#allocation8 + $0x150] sm:$0xff]
    %v1253 = vld [vmem:[#allocation8 + $0x158] sm:$0xff]
    %v1254 = vld [vmem:[#allocation8 + $0x160] sm:$0xff]
    %v1255 = vld [vmem:[#allocation8 + $0x168] sm:$0xff]
    %v1256 = vld [vmem:[#allocation8 + $0x170] sm:$0xff]
    %v1257 = vld [vmem:[#allocation8 + $0x178] sm:$0xff]
    %v1258 = vld [vmem:[#allocation8 + $0x180] sm:$0xff]
    %v1259 = vld [vmem:[#allocation8 + $0x188] sm:$0xff]
    %v1260 = vld [vmem:[#allocation8 + $0x190] sm:$0xff]
    %v1261 = vld [vmem:[#allocation8 + $0x198] sm:$0xff]
    %v1262 = vld [vmem:[#allocation8 + $0x1a0] sm:$0xff]
    %v1263 = vld [vmem:[#allocation8 + $0x1a8] sm:$0xff]
    %v1264 = vld [vmem:[#allocation8 + $0x1b0] sm:$0xff]
    %v1265 = vld [vmem:[#allocation8 + $0x1b8] sm:$0xff]
    %v1266 = vld [vmem:[#allocation8 + $0x1c0] sm:$0xff]
    %v1267 = vld [vmem:[#allocation8 + $0x1c8] sm:$0xff]
    %v1268 = vld [vmem:[#allocation8 + $0x1d0] sm:$0xff]
    %v1269 = vld [vmem:[#allocation8 + $0x1d8] sm:$0xff]
    %v1270 = vld [vmem:[#allocation8 + $0x1e0] sm:$0xff]
    %v1271 = vld [vmem:[#allocation8 + $0x1e8] sm:$0xff]
    %v1272 = vld [vmem:[#allocation8 + $0x1f0] sm:$0xff]
    %v1273 = vld [vmem:[#allocation8 + $0x1f8] sm:$0xff]
    %1274 = vmatprep.subr.mxu0 %v1211
    %1275 = vmatpush1.msra.mxu0 %v1210
    %1276 = vmatprep.subr.mxu0 %v1213
    %1277 = vmatpush1.msra.mxu0 %v1212
    %1278 = vmatprep.subr.mxu0 %v1215
    %1279 = vmatpush1.msra.mxu0 %v1214
    %1280 = vmatprep.subr.mxu0 %v1217
    %1281 = vmatpush1.msra.mxu0 %v1216
    %1282 = vmatprep.subr.mxu0 %v1219
    %1283 = vmatpush1.msra.mxu0 %v1218
    %1284 = vmatprep.subr.mxu0 %v1221
    %1285 = vmatpush1.msra.mxu0 %v1220
    %1286 = vmatprep.subr.mxu0 %v1223
    %1287 = vmatpush1.msra.mxu0 %v1222
    %1288 = vmatprep.subr.mxu0 %v1225
    %1289 = vmatpush1.msra.mxu0 %v1224
    %1290 = vmatprep.subr.mxu0 %v1227
    %1291 = vmatpush1.msra.mxu0 %v1226
    %1292 = vmatprep.subr.mxu0 %v1229
    %1293 = vmatpush1.msra.mxu0 %v1228
    %1294 = vmatprep.subr.mxu0 %v1231
    %1295 = vmatpush1.msra.mxu0 %v1230
    %1296 = vmatprep.subr.mxu0 %v1233
    %1297 = vmatpush1.msra.mxu0 %v1232
    %1298 = vmatprep.subr.mxu0 %v1235
    %1299 = vmatpush1.msra.mxu0 %v1234
    %1300 = vmatprep.subr.mxu0 %v1237
    %1301 = vmatpush1.msra.mxu0 %v1236
    %1302 = vmatprep.subr.mxu0 %v1239
    %1303 = vmatpush1.msra.mxu0 %v1238
    %1304 = vmatprep.subr.mxu0 %v1241
    %1305 = vmatpush1.msra.mxu0 %v1240
    %1306 = vmatprep.subr.mxu0 %v1243
    %1307 = vmatpush1.msra.mxu0 %v1242
    %1308 = vmatprep.subr.mxu0 %v1245
    %1309 = vmatpush1.msra.mxu0 %v1244
    %1310 = vmatprep.subr.mxu0 %v1247
    %1311 = vmatpush1.msra.mxu0 %v1246
    %1312 = vmatprep.subr.mxu0 %v1249
    %1313 = vmatpush1.msra.mxu0 %v1248
    %1314 = vmatprep.subr.mxu0 %v1251
    %1315 = vmatpush1.msra.mxu0 %v1250
    %1316 = vmatprep.subr.mxu0 %v1253
    %1317 = vmatpush1.msra.mxu0 %v1252
    %1318 = vmatprep.subr.mxu0 %v1255
    %1319 = vmatpush1.msra.mxu0 %v1254
    %1320 = vmatprep.subr.mxu0 %v1257
    %1321 = vmatpush1.msra.mxu0 %v1256
    %1322 = vmatprep.subr.mxu0 %v1259
    %1323 = vmatpush1.msra.mxu0 %v1258
    %1324 = vmatprep.subr.mxu0 %v1261
    %1325 = vmatpush1.msra.mxu0 %v1260
    %1326 = vmatprep.subr.mxu0 %v1263
    %1327 = vmatpush1.msra.mxu0 %v1262
    %1328 = vmatprep.subr.mxu0 %v1265
    %1329 = vmatpush1.msra.mxu0 %v1264
    %1330 = vmatprep.subr.mxu0 %v1267
    %1331 = vmatpush1.msra.mxu0 %v1266
    %1332 = vmatprep.subr.mxu0 %v1269
    %1333 = vmatpush1.msra.mxu0 %v1268
    %1334 = vmatprep.subr.mxu0 %v1271
    %1335 = vmatpush1.msra.mxu0 %v1270
    %1336 = vmatprep.subr.mxu0 %v1273
    %1337 = vmatpush1.msra.mxu0 %v1272
    %1338 = vmatprep.mubr.f32.mxu0 %v1209
    %1339 = vmatmul.mubr.f32.gmra.mrb[0].mxu0 %v1208
    %v1340 = vpop.f32.mrb[0].mxu0
    %v1341 = vadd.f32 0.0, %v1340
    %v1342 = vpop.f32.mrb[0].mxu0
    %v1343 = vadd.f32 0.0, %v1342
    %1344 = vdwg.mxu0
    %v1345 = vmul.f32 %v1341, %v430
    %v1346 = vmul.f32 %v1343, %v431
    %v1347 = vsub.f32 1.0, %v430
    %v1348 = vsub.f32 1.0, %v431
    %v1349 = vmul.f32 %v1345, %v1347
    %v1350 = vmul.f32 %v1346, %v1348
    %v1351 = vld [vmem:[#allocation5] sm:$0xff]
    %v1352 = vld [vmem:[#allocation5 + $0x8] sm:$0xff]
    %v1353 = vld [vmem:[#allocation5 + $0x10] sm:$0xff]
    %v1354 = vld [vmem:[#allocation5 + $0x18] sm:$0xff]
    %v1355 = vld [vmem:[#allocation5 + $0x20] sm:$0xff]
    %v1356 = vld [vmem:[#allocation5 + $0x28] sm:$0xff]
    %v1357 = vld [vmem:[#allocation5 + $0x30] sm:$0xff]
    %v1358 = vld [vmem:[#allocation5 + $0x38] sm:$0xff]
    %v1359 = vld [vmem:[#allocation5 + $0x40] sm:$0xff]
    %v1360 = vld [vmem:[#allocation5 + $0x48] sm:$0xff]
    %v1361 = vld [vmem:[#allocation5 + $0x50] sm:$0xff]
    %v1362 = vld [vmem:[#allocation5 + $0x58] sm:$0xff]
    %v1363 = vld [vmem:[#allocation5 + $0x60] sm:$0xff]
    %v1364 = vld [vmem:[#allocation5 + $0x68] sm:$0xff]
    %v1365 = vld [vmem:[#allocation5 + $0x70] sm:$0xff]
    %v1366 = vld [vmem:[#allocation5 + $0x78] sm:$0xff]
    %v1367 = vld [vmem:[#allocation5 + $0x80] sm:$0xff]
    %v1368 = vld [vmem:[#allocation5 + $0x88] sm:$0xff]
    %v1369 = vld [vmem:[#allocation5 + $0x90] sm:$0xff]
    %v1370 = vld [vmem:[#allocation5 + $0x98] sm:$0xff]
    %v1371 = vld [vmem:[#allocation5 + $0xa0] sm:$0xff]
    %v1372 = vld [vmem:[#allocation5 + $0xa8] sm:$0xff]
    %v1373 = vld [vmem:[#allocation5 + $0xb0] sm:$0xff]
    %v1374 = vld [vmem:[#allocation5 + $0xb8] sm:$0xff]
    %v1375 = vld [vmem:[#allocation5 + $0xc0] sm:$0xff]
    %v1376 = vld [vmem:[#allocation5 + $0xc8] sm:$0xff]
    %v1377 = vld [vmem:[#allocation5 + $0xd0] sm:$0xff]
    %v1378 = vld [vmem:[#allocation5 + $0xd8] sm:$0xff]
    %v1379 = vld [vmem:[#allocation5 + $0xe0] sm:$0xff]
    %v1380 = vld [vmem:[#allocation5 + $0xe8] sm:$0xff]
    %v1381 = vld [vmem:[#allocation5 + $0xf0] sm:$0xff]
    %v1382 = vld [vmem:[#allocation5 + $0xf8] sm:$0xff]
    %v1383 = vld [vmem:[#allocation5 + $0x100] sm:$0xff]
    %v1384 = vld [vmem:[#allocation5 + $0x108] sm:$0xff]
    %v1385 = vld [vmem:[#allocation5 + $0x110] sm:$0xff]
    %v1386 = vld [vmem:[#allocation5 + $0x118] sm:$0xff]
    %v1387 = vld [vmem:[#allocation5 + $0x120] sm:$0xff]
    %v1388 = vld [vmem:[#allocation5 + $0x128] sm:$0xff]
    %v1389 = vld [vmem:[#allocation5 + $0x130] sm:$0xff]
    %v1390 = vld [vmem:[#allocation5 + $0x138] sm:$0xff]
    %v1391 = vld [vmem:[#allocation5 + $0x140] sm:$0xff]
    %v1392 = vld [vmem:[#allocation5 + $0x148] sm:$0xff]
    %v1393 = vld [vmem:[#allocation5 + $0x150] sm:$0xff]
    %v1394 = vld [vmem:[#allocation5 + $0x158] sm:$0xff]
    %v1395 = vld [vmem:[#allocation5 + $0x160] sm:$0xff]
    %v1396 = vld [vmem:[#allocation5 + $0x168] sm:$0xff]
    %v1397 = vld [vmem:[#allocation5 + $0x170] sm:$0xff]
    %v1398 = vld [vmem:[#allocation5 + $0x178] sm:$0xff]
    %v1399 = vld [vmem:[#allocation5 + $0x180] sm:$0xff]
    %v1400 = vld [vmem:[#allocation5 + $0x188] sm:$0xff]
    %v1401 = vld [vmem:[#allocation5 + $0x190] sm:$0xff]
    %v1402 = vld [vmem:[#allocation5 + $0x198] sm:$0xff]
    %v1403 = vld [vmem:[#allocation5 + $0x1a0] sm:$0xff]
    %v1404 = vld [vmem:[#allocation5 + $0x1a8] sm:$0xff]
    %v1405 = vld [vmem:[#allocation5 + $0x1b0] sm:$0xff]
    %v1406 = vld [vmem:[#allocation5 + $0x1b8] sm:$0xff]
    %v1407 = vld [vmem:[#allocation5 + $0x1c0] sm:$0xff]
    %v1408 = vld [vmem:[#allocation5 + $0x1c8] sm:$0xff]
    %v1409 = vld [vmem:[#allocation5 + $0x1d0] sm:$0xff]
    %v1410 = vld [vmem:[#allocation5 + $0x1d8] sm:$0xff]
    %v1411 = vld [vmem:[#allocation5 + $0x1e0] sm:$0xff]
    %v1412 = vld [vmem:[#allocation5 + $0x1e8] sm:$0xff]
    %v1413 = vld [vmem:[#allocation5 + $0x1f0] sm:$0xff]
    %v1414 = vld [vmem:[#allocation5 + $0x1f8] sm:$0xff]
    %1415 = vmatprep.subr.mxu0 %v1352
    %1416 = vmatpush1.msra.mxu0 %v1351
    %1417 = vmatprep.subr.mxu0 %v1354
    %1418 = vmatpush1.msra.mxu0 %v1353
    %1419 = vmatprep.subr.mxu0 %v1356
    %1420 = vmatpush1.msra.mxu0 %v1355
    %1421 = vmatprep.subr.mxu0 %v1358
    %1422 = vmatpush1.msra.mxu0 %v1357
    %1423 = vmatprep.subr.mxu0 %v1360
    %1424 = vmatpush1.msra.mxu0 %v1359
    %1425 = vmatprep.subr.mxu0 %v1362
    %1426 = vmatpush1.msra.mxu0 %v1361
    %1427 = vmatprep.subr.mxu0 %v1364
    %1428 = vmatpush1.msra.mxu0 %v1363
    %1429 = vmatprep.subr.mxu0 %v1366
    %1430 = vmatpush1.msra.mxu0 %v1365
    %1431 = vmatprep.subr.mxu0 %v1368
    %1432 = vmatpush1.msra.mxu0 %v1367
    %1433 = vmatprep.subr.mxu0 %v1370
    %1434 = vmatpush1.msra.mxu0 %v1369
    %1435 = vmatprep.subr.mxu0 %v1372
    %1436 = vmatpush1.msra.mxu0 %v1371
    %1437 = vmatprep.subr.mxu0 %v1374
    %1438 = vmatpush1.msra.mxu0 %v1373
    %1439 = vmatprep.subr.mxu0 %v1376
    %1440 = vmatpush1.msra.mxu0 %v1375
    %1441 = vmatprep.subr.mxu0 %v1378
    %1442 = vmatpush1.msra.mxu0 %v1377
    %1443 = vmatprep.subr.mxu0 %v1380
    %1444 = vmatpush1.msra.mxu0 %v1379
    %1445 = vmatprep.subr.mxu0 %v1382
    %1446 = vmatpush1.msra.mxu0 %v1381
    %1447 = vmatprep.subr.mxu0 %v1384
    %1448 = vmatpush1.msra.mxu0 %v1383
    %1449 = vmatprep.subr.mxu0 %v1386
    %1450 = vmatpush1.msra.mxu0 %v1385
    %1451 = vmatprep.subr.mxu0 %v1388
    %1452 = vmatpush1.msra.mxu0 %v1387
    %1453 = vmatprep.subr.mxu0 %v1390
    %1454 = vmatpush1.msra.mxu0 %v1389
    %1455 = vmatprep.subr.mxu0 %v1392
    %1456 = vmatpush1.msra.mxu0 %v1391
    %1457 = vmatprep.subr.mxu0 %v1394
    %1458 = vmatpush1.msra.mxu0 %v1393
    %1459 = vmatprep.subr.mxu0 %v1396
    %1460 = vmatpush1.msra.mxu0 %v1395
    %1461 = vmatprep.subr.mxu0 %v1398
    %1462 = vmatpush1.msra.mxu0 %v1397
    %1463 = vmatprep.subr.mxu0 %v1400
    %1464 = vmatpush1.msra.mxu0 %v1399
    %1465 = vmatprep.subr.mxu0 %v1402
    %1466 = vmatpush1.msra.mxu0 %v1401
    %1467 = vmatprep.subr.mxu0 %v1404
    %1468 = vmatpush1.msra.mxu0 %v1403
    %1469 = vmatprep.subr.mxu0 %v1406
    %1470 = vmatpush1.msra.mxu0 %v1405
    %1471 = vmatprep.subr.mxu0 %v1408
    %1472 = vmatpush1.msra.mxu0 %v1407
    %1473 = vmatprep.subr.mxu0 %v1410
    %1474 = vmatpush1.msra.mxu0 %v1409
    %1475 = vmatprep.subr.mxu0 %v1412
    %1476 = vmatpush1.msra.mxu0 %v1411
    %1477 = vmatprep.subr.mxu0 %v1414
    %1478 = vmatpush1.msra.mxu0 %v1413
    %1479 = vmatprep.mubr.f32.mxu0 %v1350
    %1480 = vmatmul.mubr.f32.gmra.mrb[0].mxu0 %v1349
    %v1481 = vpop.f32.mrb[0].mxu0
    %v1482 = vadd.f32 0.0, %v1481
    %v1483 = vpop.f32.mrb[0].mxu0
    %v1484 = vadd.f32 0.0, %v1483
    %1485 = vdwg.mxu0
    %v1486 = vmul.f32 %v1482, %v275
    %v1487 = vmul.f32 %v1484, %v276
    %v1488 = vsub.f32 1.0, %v275
    %v1489 = vsub.f32 1.0, %v276
    %v1490 = vmul.f32 %v1486, %v1488
    %v1491 = vmul.f32 %v1487, %v1489
    %v1492 = vld [vmem:[%s2] sm:$0xff]
    %v1493 = vld [vmem:[%s2 + $0x8] sm:$0xff]
    %v1494 = vld [vmem:[%s2 + $0x10] sm:$0xff]
    %v1495 = vld [vmem:[%s2 + $0x18] sm:$0xff]
    %v1496 = vld [vmem:[%s2 + $0x20] sm:$0xff]
    %v1497 = vld [vmem:[%s2 + $0x28] sm:$0xff]
    %v1498 = vld [vmem:[%s2 + $0x30] sm:$0xff]
    %v1499 = vld [vmem:[%s2 + $0x38] sm:$0xff]
    %v1500 = vld [vmem:[%s2 + $0x40] sm:$0xff]
    %v1501 = vld [vmem:[%s2 + $0x48] sm:$0xff]
    %v1502 = vld [vmem:[%s2 + $0x50] sm:$0xff]
    %v1503 = vld [vmem:[%s2 + $0x58] sm:$0xff]
    %v1504 = vld [vmem:[%s2 + $0x60] sm:$0xff]
    %v1505 = vld [vmem:[%s2 + $0x68] sm:$0xff]
    %v1506 = vld [vmem:[%s2 + $0x70] sm:$0xff]
    %v1507 = vld [vmem:[%s2 + $0x78] sm:$0xff]
    %v1508 = vld [vmem:[%s2 + $0x80] sm:$0xff]
    %v1509 = vld [vmem:[%s2 + $0x88] sm:$0xff]
    %v1510 = vld [vmem:[%s2 + $0x90] sm:$0xff]
    %v1511 = vld [vmem:[%s2 + $0x98] sm:$0xff]
    %v1512 = vld [vmem:[%s2 + $0xa0] sm:$0xff]
    %v1513 = vld [vmem:[%s2 + $0xa8] sm:$0xff]
    %v1514 = vld [vmem:[%s2 + $0xb0] sm:$0xff]
    %v1515 = vld [vmem:[%s2 + $0xb8] sm:$0xff]
    %v1516 = vld [vmem:[%s2 + $0xc0] sm:$0xff]
    %v1517 = vld [vmem:[%s2 + $0xc8] sm:$0xff]
    %v1518 = vld [vmem:[%s2 + $0xd0] sm:$0xff]
    %v1519 = vld [vmem:[%s2 + $0xd8] sm:$0xff]
    %v1520 = vld [vmem:[%s2 + $0xe0] sm:$0xff]
    %v1521 = vld [vmem:[%s2 + $0xe8] sm:$0xff]
    %v1522 = vld [vmem:[%s2 + $0xf0] sm:$0xff]
    %v1523 = vld [vmem:[%s2 + $0xf8] sm:$0xff]
    %1524 = vmatprep.subr.mxu0 0.0
    %1525 = vmatpush1.msra.mxu0 %v1492
    %1526 = vmatprep.subr.mxu0 0.0
    %1527 = vmatpush1.msra.mxu0 %v1493
    %1528 = vmatprep.subr.mxu0 0.0
    %1529 = vmatpush1.msra.mxu0 %v1494
    %1530 = vmatprep.subr.mxu0 0.0
    %1531 = vmatpush1.msra.mxu0 %v1495
    %1532 = vmatprep.subr.mxu0 0.0
    %1533 = vmatpush1.msra.mxu0 %v1496
    %1534 = vmatprep.subr.mxu0 0.0
    %1535 = vmatpush1.msra.mxu0 %v1497
    %1536 = vmatprep.subr.mxu0 0.0
    %1537 = vmatpush1.msra.mxu0 %v1498
    %1538 = vmatprep.subr.mxu0 0.0
    %1539 = vmatpush1.msra.mxu0 %v1499
    %1540 = vmatprep.subr.mxu0 0.0
    %1541 = vmatpush1.msra.mxu0 %v1500
    %1542 = vmatprep.subr.mxu0 0.0
    %1543 = vmatpush1.msra.mxu0 %v1501
    %1544 = vmatprep.subr.mxu0 0.0
    %1545 = vmatpush1.msra.mxu0 %v1502
    %1546 = vmatprep.subr.mxu0 0.0
    %1547 = vmatpush1.msra.mxu0 %v1503
    %1548 = vmatprep.subr.mxu0 0.0
    %1549 = vmatpush1.msra.mxu0 %v1504
    %1550 = vmatprep.subr.mxu0 0.0
    %1551 = vmatpush1.msra.mxu0 %v1505
    %1552 = vmatprep.subr.mxu0 0.0
    %1553 = vmatpush1.msra.mxu0 %v1506
    %1554 = vmatprep.subr.mxu0 0.0
    %1555 = vmatpush1.msra.mxu0 %v1507
    %1556 = vmatprep.subr.mxu0 0.0
    %1557 = vmatpush1.msra.mxu0 %v1508
    %1558 = vmatprep.subr.mxu0 0.0
    %1559 = vmatpush1.msra.mxu0 %v1509
    %1560 = vmatprep.subr.mxu0 0.0
    %1561 = vmatpush1.msra.mxu0 %v1510
    %1562 = vmatprep.subr.mxu0 0.0
    %1563 = vmatpush1.msra.mxu0 %v1511
    %1564 = vmatprep.subr.mxu0 0.0
    %1565 = vmatpush1.msra.mxu0 %v1512
    %1566 = vmatprep.subr.mxu0 0.0
    %1567 = vmatpush1.msra.mxu0 %v1513
    %1568 = vmatprep.subr.mxu0 0.0
    %1569 = vmatpush1.msra.mxu0 %v1514
    %1570 = vmatprep.subr.mxu0 0.0
    %1571 = vmatpush1.msra.mxu0 %v1515
    %1572 = vmatprep.subr.mxu0 0.0
    %1573 = vmatpush1.msra.mxu0 %v1516
    %1574 = vmatprep.subr.mxu0 0.0
    %1575 = vmatpush1.msra.mxu0 %v1517
    %1576 = vmatprep.subr.mxu0 0.0
    %1577 = vmatpush1.msra.mxu0 %v1518
    %1578 = vmatprep.subr.mxu0 0.0
    %1579 = vmatpush1.msra.mxu0 %v1519
    %1580 = vmatprep.subr.mxu0 0.0
    %1581 = vmatpush1.msra.mxu0 %v1520
    %1582 = vmatprep.subr.mxu0 0.0
    %1583 = vmatpush1.msra.mxu0 %v1521
    %1584 = vmatprep.subr.mxu0 0.0
    %1585 = vmatpush1.msra.mxu0 %v1522
    %1586 = vmatprep.subr.mxu0 0.0
    %1587 = vmatpush1.msra.mxu0 %v1523
    %1588 = vmatprep.mubr.f32.mxu0 %v1491
    %1589 = vmatmul.mubr.f32.gmra.mrb[0].mxu0 %v1490
    %v1590 = vpop.f32.mrb[0].mxu0
    %v1591 = vadd.f32 0.0, %v1590
    %v1592 = vpop.f32.mrb[0].mxu0
    %1593 = vdwg.mxu0
    %1595 = vrot.lane.b32.xlu0 %v1591, 127
    %v1596 = vpop.permute.xlu0 %1595
    %vm1598 = vcmask 31744
    %1599 = vst.msk [vmem:[%s19] sm:$0xff] %vm1598, %v1596
    // Predicated region
    $region106: #{tpu_custom_call.1} parent=1 // pred_check
      _
    $region107: #{tpu_custom_call.1} parent=1 // pred_check_branch
      %1601 = sbr.rel (0) target = $region109
    $region108: #{tpu_custom_call.1} parent=1 // pred_region
      _
    $region109: #{tpu_custom_call.1} parent=1 // pred_fallthru
      _
    // Predicated region
    $region110: #{tpu_custom_call.1} parent=1 // pred_check
      _
    $region111: #{tpu_custom_call.1} parent=1 // pred_check_branch
      %1603 = sbr.rel (0) target = $region113
    $region112: #{tpu_custom_call.1} parent=1 // pred_region
      _
    $region113: #{tpu_custom_call.1} parent=1 // pred_fallthru
      _
    // Predicated region
    $region114: #{tpu_custom_call.1} parent=1 // pred_check
      _
    $region115: #{tpu_custom_call.1} parent=1 // pred_check_branch
      %1605 = sbr.rel (0) target = $region117
    $region116: #{tpu_custom_call.1} parent=1 // pred_region
      _
    $region117: #{tpu_custom_call.1} parent=1 // pred_fallthru
      _
    // Predicated region
    $region118: #{tpu_custom_call.1} parent=1 // pred_check
      _
    $region119: #{tpu_custom_call.1} parent=1 // pred_check_branch
      %1607 = sbr.rel (0) target = $region121
    $region120: #{tpu_custom_call.1} parent=1 // pred_region
      _
    $region121: #{tpu_custom_call.1} parent=1 // pred_fallthru
      _
    %1608 = vsyncpa [#allocation4], 1
    %1609 = vsyncpa [#allocation6], 1
    %1610 = vsyncpa [#allocation9], 1
    %1611 = vsyncpa [#allocation12], 1
    %1612 = vsyncpa [#allocation15], 1

</llo_original>
